<compile_context>
chip_gen: v6e
topology: v6e:2x2x1
jax: 0.10.0
libtpu: 0.0.40
codegen_flags: <defaults>
</compile_context>

<pallas_src>
import functools
import math

import jax
import jax.numpy as jnp
from jax.experimental import pallas as pl
from jax.experimental.pallas import tpu as pltpu


# ----------------------------------------------------------------------------
# Kernel: one grid step = (batch n, query tile qi, kv tile ki); heads unrolled inside.
# ----------------------------------------------------------------------------
def _flash_mha_kernel(q_ref, k_ref, v_ref, mask_ref,
                      wq_ref, wk_ref, wv_ref, wfc_ref, b_ref,
                      out_ref,
                      qp_ref, m_ref, l_ref, acc_ref,
                      *, heads, head_dim):
    ki = pl.program_id(2)
    last_ki = pl.num_programs(2) - 1

    @pl.when(ki == 0)
    def _init():
        # Project the query tile once per (batch, q-tile); 1/sqrt(E) already folded into wq.
        qp_ref[...] = jnp.dot(q_ref[0], wq_ref[...],
                              preferred_element_type=jnp.float32).astype(jnp.bfloat16)
        m_ref[...] = jnp.full(m_ref.shape, -jnp.inf, jnp.float32)
        l_ref[...] = jnp.zeros(l_ref.shape, jnp.float32)
        acc_ref[...] = jnp.zeros(acc_ref.shape, jnp.float32)

    # Project this KV tile for every head at once (block-diagonal weights); cast to bf16
    # immediately so only bf16 (tk, E) temporaries live across the heads loop.
    kp = jnp.dot(k_ref[0], wk_ref[...],
                 preferred_element_type=jnp.float32).astype(jnp.bfloat16)   # (tk, E)
    vp = jnp.dot(v_ref[0], wv_ref[...],
                 preferred_element_type=jnp.float32).astype(jnp.bfloat16)   # (tk, E)

    masked = mask_ref[0].astype(jnp.int32) == 0           # (tq, tk), True = masked out
    neg_inf = jnp.float32(-1e20)

    # TODO(synk): if heads grows large (>=16), switch to lax.fori_loop(..., unroll=True) with
    # pl.ds head slices and drop the kron trick (projection FLOPs scale with H).
    for h in range(heads):
        lo = h * head_dim
        hi = lo + head_dim
        qh = qp_ref[:, lo:hi]                              # (tq, D) bf16
        kh = kp[:, lo:hi]                                  # (tk, D) bf16
        vh = vp[:, lo:hi]                                  # (tk, D) bf16

        # energy = q . k^T without materialising a transpose (contract last dims of both).
        s = jax.lax.dot_general(qh, kh, (((1,), (1,)), ((), ())),
                                preferred_element_type=jnp.float32)         # (tq, tk) f32
        s = jnp.where(masked, neg_inf, s)

        # Online softmax update, unnormalised (normalisation deferred to the last KV step).
        # TODO(synk): on v6e/v7x the exp could run in bf16 (EUP bf16 path); kept f32 so the
        # identical kernel stays accurate on v5e, whose EUP has no bf16 path.
        m_prev = m_ref[h]                                  # (tq, 1)
        m_new = jnp.maximum(m_prev, jnp.max(s, axis=-1, keepdims=True))
        alpha = jnp.exp(m_prev - m_new)                    # (tq, 1)
        p = jnp.exp(s - m_new)                             # (tq, tk) f32
        l_ref[h] = alpha * l_ref[h] + jnp.sum(p, axis=-1, keepdims=True)
        m_ref[h] = m_new
        acc_ref[:, lo:hi] = alpha * acc_ref[:, lo:hi] + jnp.dot(
            p.astype(jnp.bfloat16), vh, preferred_element_type=jnp.float32)

    @pl.when(ki == last_ki)
    def _finalize():
        # Deferred per-head normalisation, one lane-dense (tq, E) concat straight into the
        # fused fc_out matmul + bias (no HBM round-trip, no sub-lane scatter of the output).
        parts = []
        for h in range(heads):
            lo = h * head_dim
            hi = lo + head_dim
            inv_l = pl.reciprocal(l_ref[h], approx=True)   # (tq, 1)
            parts.append(acc_ref[:, lo:hi] * inv_l)
        ctx = jnp.concatenate(parts, axis=-1).astype(jnp.bfloat16)          # (tq, E)
        y = jnp.dot(ctx, wfc_ref[...], preferred_element_type=jnp.float32)
        out_ref[0] = (y + b_ref[...]).astype(out_ref.dtype)


def _pick_tile(full, preferred, quantum):
    """Largest multiple of `quantum` <= `preferred` that divides `full`; else the full axis."""
    if full <= preferred:
        return full
    t = (preferred // quantum) * quantum
    while t >= quantum:
        if full % t == 0:
            return t
        t -= quantum
    return full


# ----------------------------------------------------------------------------
# Wrapper reproducing SelfAttention.forward semantics.
# ----------------------------------------------------------------------------
def self_attention_forward(params, values, keys, query, mask, *, embed_size, heads):
    head_dim = embed_size // heads
    assert head_dim * heads == embed_size, "Embed size needs to be div by heads"
    N = query.shape[0]
    value_len, key_len, query_len = values.shape[1], keys.shape[1], query.shape[1]
    assert value_len == key_len, "value_len must equal key_len"
    E = embed_size

    # Tile sizes: biggest that stays (8,128)-legal in the BlockSpecs and VMEM-friendly on
    # v7x's 64 MiB VMEM (tq*E, 2*tk*E, tq*tk are all double-buffered per grid step).
    tq = _pick_tile(query_len, 128, 8)
    tk = _pick_tile(key_len, 512, 128)

    scale = 1.0 / math.sqrt(embed_size)
    eye_h = jnp.eye(heads, dtype=jnp.float32)
    # kron(I_H, W^T) is block-diagonal: x(S,E) @ it == per-head x_h @ W^T for every head.
    wq_bd = (jnp.kron(eye_h, params["wq"].T) * scale).astype(jnp.bfloat16)  # scale folded in
    wk_bd = jnp.kron(eye_h, params["wk"].T).astype(jnp.bfloat16)
    wv_bd = jnp.kron(eye_h, params["wv"].T).astype(jnp.bfloat16)
    wfc_t = params["w_fc"].T.astype(jnp.bfloat16)
    b_fc = params["b_fc"].reshape(1, embed_size).astype(jnp.float32)

    # bf16 activations: the kernel only consumes them as MXU operands, so f32 inputs would
    # just double HBM DMA traffic and the activation tile VMEM footprint.
    q_bf = query.astype(jnp.bfloat16)
    k_bf = keys.astype(jnp.bfloat16)
    v_bf = values.astype(jnp.bfloat16)

    # int8 mask: 1 byte per (q,k) pair, 0 = masked (matches masked_fill(mask==0, -1e20)).
    # TODO(synk): for causal masks generate the mask in-kernel with broadcasted_iota and skip
    # fully-masked KV tiles instead of DMAing (Sq, Sk) bytes per batch element.
    mask_i8 = (mask.reshape(N, query_len, key_len) != 0).astype(jnp.int8)

    kernel = functools.partial(_flash_mha_kernel, heads=heads, head_dim=head_dim)

    grid = (N, query_len // tq, key_len // tk)

    return pl.pallas_call(
        kernel,
        out_shape=jax.ShapeDtypeStruct((N, query_len, E), jnp.float32),
        grid_spec=pltpu.PrefetchScalarGridSpec(
            num_scalar_prefetch=0,
            grid=grid,
            in_specs=[
                pl.BlockSpec((1, tq, E), lambda n, qi, ki: (n, qi, 0)),    # query tile
                pl.BlockSpec((1, tk, E), lambda n, qi, ki: (n, ki, 0)),    # key tile
                pl.BlockSpec((1, tk, E), lambda n, qi, ki: (n, ki, 0)),    # value tile
                pl.BlockSpec((1, tq, tk), lambda n, qi, ki: (n, qi, ki)),  # mask tile (int8)
                # Grid-invariant operands (constant index maps).
                # TODO(synk): single-buffer these (pipeline_mode=pl.Buffered(1)) once that is
                # supported end-to-end by pallas_call; at large E the redundant second buffer
                # wastes 4*E^2*2B of VMEM.
                pl.BlockSpec((E, E), lambda n, qi, ki: (0, 0)),            # kron Wq^T * scale
                pl.BlockSpec((E, E), lambda n, qi, ki: (0, 0)),            # kron Wk^T
                pl.BlockSpec((E, E), lambda n, qi, ki: (0, 0)),            # kron Wv^T
                pl.BlockSpec((E, E), lambda n, qi, ki: (0, 0)),            # W_fc^T
                pl.BlockSpec((1, E), lambda n, qi, ki: (0, 0)),            # b_fc
            ],
            out_specs=pl.BlockSpec((1, tq, E), lambda n, qi, ki: (n, qi, 0)),
            scratch_shapes=[
                pltpu.VMEM((tq, E), jnp.bfloat16),          # projected query tile (resident)
                pltpu.VMEM((heads, tq, 1), jnp.float32),    # online-softmax running max m
                pltpu.VMEM((heads, tq, 1), jnp.float32),    # online-softmax running sum l
                pltpu.VMEM((tq, E), jnp.float32),           # unnormalised context accumulator
            ],
        ),
        compiler_params=pltpu.CompilerParams(
            dimension_semantics=("parallel", "parallel", "arbitrary"),
            vmem_limit_bytes=48 * 1024 * 1024,   # explicit budget; fits v7x's 64 MiB VMEM
        ),
    )(q_bf, k_bf, v_bf, mask_i8, wq_bd, wk_bd, wv_bd, wfc_t, b_fc)


# ----------------------------------------------------------------------------
# Pure-JAX fp32 reference (mirrors the canonical PyTorch SelfAttention forward).
# ----------------------------------------------------------------------------
def self_attention_reference(params, values, keys, query, mask, *, embed_size, heads):
    head_dim = embed_size // heads
    N = query.shape[0]
    vl, kl, ql = values.shape[1], keys.shape[1], query.shape[1]
    v = values.reshape(N, vl, heads, head_dim) @ params["wv"].T
    k = keys.reshape(N, kl, heads, head_dim) @ params["wk"].T
    q = query.reshape(N, ql, heads, head_dim) @ params["wq"].T
    energy = jnp.einsum("nqhd,nkhd->nhqk", q, k)
    m = mask.reshape(N, 1, ql, kl)
    energy = jnp.where(m == 0, -1e20, energy)
    attn = jax.nn.softmax(energy / math.sqrt(embed_size), axis=3)
    out = jnp.einsum("nhql,nlhd->nqhd", attn, v).reshape(N, ql, heads * head_dim)
    return out @ params["w_fc"].T + params["b_fc"].reshape(-1)


if __name__ == "__main__":
    embed_size, heads = 32, 4
    head_dim = embed_size // heads
    N, seq = 2, 8

    key = jax.random.PRNGKey(0)
    ks = jax.random.split(key, 9)
    bound_h = 1.0 / math.sqrt(head_dim)
    bound_e = 1.0 / math.sqrt(embed_size)
    params = {
        "wq": jax.random.uniform(ks[0], (head_dim, head_dim), jnp.float32, -bound_h, bound_h),
        "wk": jax.random.uniform(ks[1], (head_dim, head_dim), jnp.float32, -bound_h, bound_h),
        "wv": jax.random.uniform(ks[2], (head_dim, head_dim), jnp.float32, -bound_h, bound_h),
        "w_fc": jax.random.uniform(ks[3], (embed_size, embed_size), jnp.float32, -bound_e, bound_e),
        "b_fc": jax.random.uniform(ks[4], (1, embed_size), jnp.float32, -bound_e, bound_e),
    }

    values = jax.random.normal(ks[5], (N, seq, embed_size), jnp.float32)
    keys_in = jax.random.normal(ks[6], (N, seq, embed_size), jnp.float32)
    query = jax.random.normal(ks[7], (N, seq, embed_size), jnp.float32)
    # Causal-style mask: 1 = attend, 0 = masked.
    mask = jnp.tril(jnp.ones((seq, seq), jnp.float32))
    mask = jnp.broadcast_to(mask, (N, 1, seq, seq))

    out = self_attention_forward(params, values, keys_in, query, mask,
                                 embed_size=embed_size, heads=heads)
    out = jax.block_until_ready(out)

    ref = self_attention_reference(params, values, keys_in, query, mask,
                                   embed_size=embed_size, heads=heads)
    assert out.shape == (N, seq, embed_size)
    # Tolerance accounts for bf16 MXU operands (f32 accumulation) and the approx reciprocal
    # vs. the pure-fp32 reference.
    max_err = float(jnp.max(jnp.abs(out - ref)))
    assert jnp.allclose(out, ref, atol=5e-2, rtol=5e-2), max_err
    print("KERNEL_OK")
</pallas_src>

<mosaic_0001>
module attributes {stable_mosaic.version = 11 : i64} {
  func.func @_flash_mha_kernel(%arg0: i32, %arg1: i32, %arg2: i32, %arg3: memref<1x8x32xbf16, #tpu.memory_space<vmem>>, %arg4: memref<1x8x32xbf16, #tpu.memory_space<vmem>>, %arg5: memref<1x8x32xbf16, #tpu.memory_space<vmem>>, %arg6: memref<1x8x8xi8, #tpu.memory_space<vmem>>, %arg7: memref<32x32xbf16, #tpu.memory_space<vmem>>, %arg8: memref<32x32xbf16, #tpu.memory_space<vmem>>, %arg9: memref<32x32xbf16, #tpu.memory_space<vmem>>, %arg10: memref<32x32xbf16, #tpu.memory_space<vmem>>, %arg11: memref<1x32xf32, #tpu.memory_space<vmem>>, %arg12: memref<1x8x32xf32, #tpu.memory_space<vmem>>, %arg13: memref<8x32xbf16, #tpu.memory_space<vmem>>, %arg14: memref<4x8x1xf32, #tpu.memory_space<vmem>>, %arg15: memref<4x8x1xf32, #tpu.memory_space<vmem>>, %arg16: memref<8x32xf32, #tpu.memory_space<vmem>>) attributes {dimension_semantics = [#tpu.dimension_semantics<parallel>, #tpu.dimension_semantics<parallel>, #tpu.dimension_semantics<arbitrary>], iteration_bounds = array<i64: 2, 1, 1>, scalar_prefetch = 0 : i64, scratch_operands = 4 : i64, tpu.core_type = #tpu.core_type<tc>, window_params = [{transform_indices = @transform_0, window_bounds = array<i64: 1, 8, 32>}, {transform_indices = @transform_1, window_bounds = array<i64: 1, 8, 32>}, {transform_indices = @transform_2, window_bounds = array<i64: 1, 8, 32>}, {transform_indices = @transform_3, window_bounds = array<i64: 1, 8, 8>}, {pipeline_mode = #tpu.pipeline_mode<synchronous>, transform_indices = @transform_4, window_bounds = array<i64: 32, 32>}, {pipeline_mode = #tpu.pipeline_mode<synchronous>, transform_indices = @transform_5, window_bounds = array<i64: 32, 32>}, {pipeline_mode = #tpu.pipeline_mode<synchronous>, transform_indices = @transform_6, window_bounds = array<i64: 32, 32>}, {pipeline_mode = #tpu.pipeline_mode<synchronous>, transform_indices = @transform_7, window_bounds = array<i64: 32, 32>}, {pipeline_mode = #tpu.pipeline_mode<synchronous>, transform_indices = @transform_8, window_bounds = array<i64: 1, 32>}, {transform_indices = @transform_9, window_bounds = array<i64: 1, 8, 32>}]} {
    %c0_i32 = arith.constant 0 : i32
    %0 = arith.cmpi eq, %arg2, %c0_i32 : i32
    %1 = arith.extui %0 : i1 to i32
    %c0_i32_0 = arith.constant 0 : i32
    %2 = arith.cmpi ne, %1, %c0_i32_0 : i32
    scf.if %2 {
      %c0_103 = arith.constant 0 : index
      %c0_104 = arith.constant 0 : index
      %c0_105 = arith.constant 0 : index
      %161 = vector.load %arg3[%c0_103, %c0_104, %c0_105] : memref<1x8x32xbf16, #tpu.memory_space<vmem>>, vector<1x8x32xbf16>
      %162 = vector.shape_cast %161 : vector<1x8x32xbf16> to vector<8x32xbf16>
      %c0_106 = arith.constant 0 : index
      %c0_107 = arith.constant 0 : index
      %163 = vector.load %arg7[%c0_106, %c0_107] : memref<32x32xbf16, #tpu.memory_space<vmem>>, vector<32x32xbf16>
      %cst_108 = arith.constant dense<0.000000e+00> : vector<8x32xf32>
      %164 = tpu.matmul %162, %163, %cst_108 {dimension_numbers = #tpu.dot_dimension_numbers<[1], [0], [0], [1], [0, 0, 1, 1], [], []>} : vector<8x32xbf16>, vector<32x32xbf16>, vector<8x32xf32> -> vector<8x32xf32>
      %165 = arith.truncf %164 : vector<8x32xf32> to vector<8x32xbf16>
      %c0_109 = arith.constant 0 : index
      %c0_110 = arith.constant 0 : index
      %166 = vector.load %arg13[%c0_109, %c0_110] : memref<8x32xbf16, #tpu.memory_space<vmem>>, vector<8x32xbf16>
      tpu.vector_store %arg13[%c0_109, %c0_110], %165 {strides = array<i32>} : memref<8x32xbf16, #tpu.memory_space<vmem>>, vector<8x32xbf16>,
      %cst_111 = arith.constant 0xFF800000 : f32
      %167 = vector.broadcast %cst_111 : f32 to vector<4x8x1xf32>
      %c0_112 = arith.constant 0 : index
      %c0_113 = arith.constant 0 : index
      %c0_114 = arith.constant 0 : index
      %168 = vector.load %arg14[%c0_112, %c0_113, %c0_114] : memref<4x8x1xf32, #tpu.memory_space<vmem>>, vector<4x8x1xf32>
      tpu.vector_store %arg14[%c0_112, %c0_113, %c0_114], %167 {strides = array<i32>} : memref<4x8x1xf32, #tpu.memory_space<vmem>>, vector<4x8x1xf32>,
      %cst_115 = arith.constant 0.000000e+00 : f32
      %169 = vector.broadcast %cst_115 : f32 to vector<4x8x1xf32>
      %c0_116 = arith.constant 0 : index
      %c0_117 = arith.constant 0 : index
      %c0_118 = arith.constant 0 : index
      %170 = vector.load %arg15[%c0_116, %c0_117, %c0_118] : memref<4x8x1xf32, #tpu.memory_space<vmem>>, vector<4x8x1xf32>
      tpu.vector_store %arg15[%c0_116, %c0_117, %c0_118], %169 {strides = array<i32>} : memref<4x8x1xf32, #tpu.memory_space<vmem>>, vector<4x8x1xf32>,
      %cst_119 = arith.constant 0.000000e+00 : f32
      %171 = vector.broadcast %cst_119 : f32 to vector<8x32xf32>
      %c0_120 = arith.constant 0 : index
      %c0_121 = arith.constant 0 : index
      %172 = vector.load %arg16[%c0_120, %c0_121] : memref<8x32xf32, #tpu.memory_space<vmem>>, vector<8x32xf32>
      tpu.vector_store %arg16[%c0_120, %c0_121], %171 {strides = array<i32>} : memref<8x32xf32, #tpu.memory_space<vmem>>, vector<8x32xf32>,
    } else {
    }
    %c0 = arith.constant 0 : index
    %c0_1 = arith.constant 0 : index
    %c0_2 = arith.constant 0 : index
    %3 = vector.load %arg4[%c0, %c0_1, %c0_2] : memref<1x8x32xbf16, #tpu.memory_space<vmem>>, vector<1x8x32xbf16>
    %4 = vector.shape_cast %3 : vector<1x8x32xbf16> to vector<8x32xbf16>
    %c0_3 = arith.constant 0 : index
    %c0_4 = arith.constant 0 : index
    %5 = vector.load %arg8[%c0_3, %c0_4] : memref<32x32xbf16, #tpu.memory_space<vmem>>, vector<32x32xbf16>
    %cst = arith.constant dense<0.000000e+00> : vector<8x32xf32>
    %6 = tpu.matmul %4, %5, %cst {dimension_numbers = #tpu.dot_dimension_numbers<[1], [0], [0], [1], [0, 0, 1, 1], [], []>} : vector<8x32xbf16>, vector<32x32xbf16>, vector<8x32xf32> -> vector<8x32xf32>
    %7 = arith.truncf %6 : vector<8x32xf32> to vector<8x32xbf16>
    %c0_5 = arith.constant 0 : index
    %c0_6 = arith.constant 0 : index
    %c0_7 = arith.constant 0 : index
    %8 = vector.load %arg5[%c0_5, %c0_6, %c0_7] : memref<1x8x32xbf16, #tpu.memory_space<vmem>>, vector<1x8x32xbf16>
    %9 = vector.shape_cast %8 : vector<1x8x32xbf16> to vector<8x32xbf16>
    %c0_8 = arith.constant 0 : index
    %c0_9 = arith.constant 0 : index
    %10 = vector.load %arg9[%c0_8, %c0_9] : memref<32x32xbf16, #tpu.memory_space<vmem>>, vector<32x32xbf16>
    %cst_10 = arith.constant dense<0.000000e+00> : vector<8x32xf32>
    %11 = tpu.matmul %9, %10, %cst_10 {dimension_numbers = #tpu.dot_dimension_numbers<[1], [0], [0], [1], [0, 0, 1, 1], [], []>} : vector<8x32xbf16>, vector<32x32xbf16>, vector<8x32xf32> -> vector<8x32xf32>
    %12 = arith.truncf %11 : vector<8x32xf32> to vector<8x32xbf16>
    %c0_11 = arith.constant 0 : index
    %c0_12 = arith.constant 0 : index
    %c0_13 = arith.constant 0 : index
    %13 = vector.load %arg6[%c0_11, %c0_12, %c0_13] : memref<1x8x8xi8, #tpu.memory_space<vmem>>, vector<1x8x8xi8>
    %14 = vector.shape_cast %13 : vector<1x8x8xi8> to vector<8x8xi8>
    %15 = arith.extsi %14 : vector<8x8xi8> to vector<8x8xi32>
    %c0_i32_14 = arith.constant 0 : i32
    %16 = vector.broadcast %c0_i32_14 : i32 to vector<8x8xi32>
    %17 = arith.cmpi eq, %15, %16 : vector<8x8xi32>
    %c0_15 = arith.constant 0 : index
    %c0_16 = arith.constant 0 : index
    %18 = vector.load %arg13[%c0_15, %c0_16] : memref<8x32xbf16, #tpu.memory_space<vmem>>, vector<8x8xbf16>
    %19 = vector.extract_strided_slice %7 {offsets = [0, 0], sizes = [8, 8], strides = [1, 1]} : vector<8x32xbf16> to vector<8x8xbf16>
    %20 = vector.extract_strided_slice %12 {offsets = [0, 0], sizes = [8, 8], strides = [1, 1]} : vector<8x32xbf16> to vector<8x8xbf16>
    %cst_17 = arith.constant dense<0.000000e+00> : vector<8x8xf32>
    %21 = tpu.matmul %18, %19, %cst_17 {dimension_numbers = #tpu.dot_dimension_numbers<[1], [1], [0], [0], [0, 0, 1, 0], [], []>} : vector<8x8xbf16>, vector<8x8xbf16>, vector<8x8xf32> -> vector<8x8xf32>
    %cst_18 = arith.constant -1.000000e+20 : f32
    %22 = vector.broadcast %cst_18 : f32 to vector<8x8xf32>
    %23 = arith.select %17, %22, %21 : vector<8x8xi1>, vector<8x8xf32>
    %c0_19 = arith.constant 0 : index
    %c0_20 = arith.constant 0 : index
    %c0_21 = arith.constant 0 : index
    %24 = vector.load %arg14[%c0_19, %c0_20, %c0_21] : memref<4x8x1xf32, #tpu.memory_space<vmem>>, vector<1x8x1xf32>
    %25 = vector.shape_cast %24 : vector<1x8x1xf32> to vector<8x1xf32>
    %cst_22 = arith.constant dense<0xFF800000> : vector<8xf32>
    %26 = vector.multi_reduction <maximumf>, %23, %cst_22 [1] : vector<8x8xf32> to vector<8xf32>
    %27 = vector.shape_cast %26 : vector<8xf32> to vector<8x1xf32>
    %28 = arith.maximumf %25, %27 : vector<8x1xf32>
    %29 = arith.subf %25, %28 : vector<8x1xf32>
    %30 = math.exp %29 : vector<8x1xf32>
    %31 = vector.broadcast %28 : vector<8x1xf32> to vector<8x8xf32>
    %32 = arith.subf %23, %31 : vector<8x8xf32>
    %33 = math.exp %32 : vector<8x8xf32>
    %c0_23 = arith.constant 0 : index
    %c0_24 = arith.constant 0 : index
    %c0_25 = arith.constant 0 : index
    %34 = vector.load %arg15[%c0_23, %c0_24, %c0_25] : memref<4x8x1xf32, #tpu.memory_space<vmem>>, vector<1x8x1xf32>
    %35 = vector.shape_cast %34 : vector<1x8x1xf32> to vector<8x1xf32>
    %36 = arith.mulf %30, %35 : vector<8x1xf32>
    %cst_26 = arith.constant dense<0.000000e+00> : vector<8xf32>
    %37 = vector.multi_reduction <add>, %33, %cst_26 [1] : vector<8x8xf32> to vector<8xf32>
    %38 = vector.shape_cast %37 : vector<8xf32> to vector<8x1xf32>
    %39 = arith.addf %36, %38 : vector<8x1xf32>
    %c0_27 = arith.constant 0 : index
    %c0_28 = arith.constant 0 : index
    %c0_29 = arith.constant 0 : index
    %40 = vector.load %arg15[%c0_27, %c0_28, %c0_29] : memref<4x8x1xf32, #tpu.memory_space<vmem>>, vector<1x8x1xf32>
    %41 = vector.shape_cast %40 : vector<1x8x1xf32> to vector<8x1xf32>
    %42 = vector.shape_cast %39 : vector<8x1xf32> to vector<1x8x1xf32>
    tpu.vector_store %arg15[%c0_27, %c0_28, %c0_29], %42 {strides = array<i32>} : memref<4x8x1xf32, #tpu.memory_space<vmem>>, vector<1x8x1xf32>,
    %c0_30 = arith.constant 0 : index
    %c0_31 = arith.constant 0 : index
    %c0_32 = arith.constant 0 : index
    %43 = vector.load %arg14[%c0_30, %c0_31, %c0_32] : memref<4x8x1xf32, #tpu.memory_space<vmem>>, vector<1x8x1xf32>
    %44 = vector.shape_cast %43 : vector<1x8x1xf32> to vector<8x1xf32>
    %45 = vector.shape_cast %28 : vector<8x1xf32> to vector<1x8x1xf32>
    tpu.vector_store %arg14[%c0_30, %c0_31, %c0_32], %45 {strides = array<i32>} : memref<4x8x1xf32, #tpu.memory_space<vmem>>, vector<1x8x1xf32>,
    %c0_33 = arith.constant 0 : index
    %c0_34 = arith.constant 0 : index
    %46 = vector.load %arg16[%c0_33, %c0_34] : memref<8x32xf32, #tpu.memory_space<vmem>>, vector<8x8xf32>
    %47 = vector.broadcast %30 : vector<8x1xf32> to vector<8x8xf32>
    %48 = arith.mulf %47, %46 : vector<8x8xf32>
    %49 = arith.truncf %33 : vector<8x8xf32> to vector<8x8xbf16>
    %cst_35 = arith.constant dense<0.000000e+00> : vector<8x8xf32>
    %50 = tpu.matmul %49, %20, %cst_35 {dimension_numbers = #tpu.dot_dimension_numbers<[1], [0], [0], [1], [0, 0, 1, 1], [], []>} : vector<8x8xbf16>, vector<8x8xbf16>, vector<8x8xf32> -> vector<8x8xf32>
    %51 = arith.addf %48, %50 : vector<8x8xf32>
    %c0_36 = arith.constant 0 : index
    %c0_37 = arith.constant 0 : index
    %52 = vector.load %arg16[%c0_36, %c0_37] : memref<8x32xf32, #tpu.memory_space<vmem>>, vector<8x8xf32>
    tpu.vector_store %arg16[%c0_36, %c0_37], %51 {strides = array<i32>} : memref<8x32xf32, #tpu.memory_space<vmem>>, vector<8x8xf32>,
    %c0_38 = arith.constant 0 : index
    %c8 = arith.constant 8 : index
    %53 = vector.load %arg13[%c0_38, %c8] : memref<8x32xbf16, #tpu.memory_space<vmem>>, vector<8x8xbf16>
    %54 = vector.extract_strided_slice %7 {offsets = [0, 8], sizes = [8, 8], strides = [1, 1]} : vector<8x32xbf16> to vector<8x8xbf16>
    %55 = vector.extract_strided_slice %12 {offsets = [0, 8], sizes = [8, 8], strides = [1, 1]} : vector<8x32xbf16> to vector<8x8xbf16>
    %cst_39 = arith.constant dense<0.000000e+00> : vector<8x8xf32>
    %56 = tpu.matmul %53, %54, %cst_39 {dimension_numbers = #tpu.dot_dimension_numbers<[1], [1], [0], [0], [0, 0, 1, 0], [], []>} : vector<8x8xbf16>, vector<8x8xbf16>, vector<8x8xf32> -> vector<8x8xf32>
    %cst_40 = arith.constant -1.000000e+20 : f32
    %57 = vector.broadcast %cst_40 : f32 to vector<8x8xf32>
    %58 = arith.select %17, %57, %56 : vector<8x8xi1>, vector<8x8xf32>
    %c1 = arith.constant 1 : index
    %c0_41 = arith.constant 0 : index
    %c0_42 = arith.constant 0 : index
    %59 = vector.load %arg14[%c1, %c0_41, %c0_42] : memref<4x8x1xf32, #tpu.memory_space<vmem>>, vector<1x8x1xf32>
    %60 = vector.shape_cast %59 : vector<1x8x1xf32> to vector<8x1xf32>
    %cst_43 = arith.constant dense<0xFF800000> : vector<8xf32>
    %61 = vector.multi_reduction <maximumf>, %58, %cst_43 [1] : vector<8x8xf32> to vector<8xf32>
    %62 = vector.shape_cast %61 : vector<8xf32> to vector<8x1xf32>
    %63 = arith.maximumf %60, %62 : vector<8x1xf32>
    %64 = arith.subf %60, %63 : vector<8x1xf32>
    %65 = math.exp %64 : vector<8x1xf32>
    %66 = vector.broadcast %63 : vector<8x1xf32> to vector<8x8xf32>
    %67 = arith.subf %58, %66 : vector<8x8xf32>
    %68 = math.exp %67 : vector<8x8xf32>
    %c1_44 = arith.constant 1 : index
    %c0_45 = arith.constant 0 : index
    %c0_46 = arith.constant 0 : index
    %69 = vector.load %arg15[%c1_44, %c0_45, %c0_46] : memref<4x8x1xf32, #tpu.memory_space<vmem>>, vector<1x8x1xf32>
    %70 = vector.shape_cast %69 : vector<1x8x1xf32> to vector<8x1xf32>
    %71 = arith.mulf %65, %70 : vector<8x1xf32>
    %cst_47 = arith.constant dense<0.000000e+00> : vector<8xf32>
    %72 = vector.multi_reduction <add>, %68, %cst_47 [1] : vector<8x8xf32> to vector<8xf32>
    %73 = vector.shape_cast %72 : vector<8xf32> to vector<8x1xf32>
    %74 = arith.addf %71, %73 : vector<8x1xf32>
    %c1_48 = arith.constant 1 : index
    %c0_49 = arith.constant 0 : index
    %c0_50 = arith.constant 0 : index
    %75 = vector.load %arg15[%c1_48, %c0_49, %c0_50] : memref<4x8x1xf32, #tpu.memory_space<vmem>>, vector<1x8x1xf32>
    %76 = vector.shape_cast %75 : vector<1x8x1xf32> to vector<8x1xf32>
    %77 = vector.shape_cast %74 : vector<8x1xf32> to vector<1x8x1xf32>
    tpu.vector_store %arg15[%c1_48, %c0_49, %c0_50], %77 {strides = array<i32>} : memref<4x8x1xf32, #tpu.memory_space<vmem>>, vector<1x8x1xf32>,
    %c1_51 = arith.constant 1 : index
    %c0_52 = arith.constant 0 : index
    %c0_53 = arith.constant 0 : index
    %78 = vector.load %arg14[%c1_51, %c0_52, %c0_53] : memref<4x8x1xf32, #tpu.memory_space<vmem>>, vector<1x8x1xf32>
    %79 = vector.shape_cast %78 : vector<1x8x1xf32> to vector<8x1xf32>
    %80 = vector.shape_cast %63 : vector<8x1xf32> to vector<1x8x1xf32>
    tpu.vector_store %arg14[%c1_51, %c0_52, %c0_53], %80 {strides = array<i32>} : memref<4x8x1xf32, #tpu.memory_space<vmem>>, vector<1x8x1xf32>,
    %c0_54 = arith.constant 0 : index
    %c8_55 = arith.constant 8 : index
    %81 = vector.load %arg16[%c0_54, %c8_55] : memref<8x32xf32, #tpu.memory_space<vmem>>, vector<8x8xf32>
    %82 = vector.broadcast %65 : vector<8x1xf32> to vector<8x8xf32>
    %83 = arith.mulf %82, %81 : vector<8x8xf32>
    %84 = arith.truncf %68 : vector<8x8xf32> to vector<8x8xbf16>
    %cst_56 = arith.constant dense<0.000000e+00> : vector<8x8xf32>
    %85 = tpu.matmul %84, %55, %cst_56 {dimension_numbers = #tpu.dot_dimension_numbers<[1], [0], [0], [1], [0, 0, 1, 1], [], []>} : vector<8x8xbf16>, vector<8x8xbf16>, vector<8x8xf32> -> vector<8x8xf32>
    %86 = arith.addf %83, %85 : vector<8x8xf32>
    %c0_57 = arith.constant 0 : index
    %c8_58 = arith.constant 8 : index
    %87 = vector.load %arg16[%c0_57, %c8_58] : memref<8x32xf32, #tpu.memory_space<vmem>>, vector<8x8xf32>
    tpu.vector_store %arg16[%c0_57, %c8_58], %86 {strides = array<i32>} : memref<8x32xf32, #tpu.memory_space<vmem>>, vector<8x8xf32>,
    %c0_59 = arith.constant 0 : index
    %c16 = arith.constant 16 : index
    %88 = vector.load %arg13[%c0_59, %c16] : memref<8x32xbf16, #tpu.memory_space<vmem>>, vector<8x8xbf16>
    %89 = vector.extract_strided_slice %7 {offsets = [0, 16], sizes = [8, 8], strides = [1, 1]} : vector<8x32xbf16> to vector<8x8xbf16>
    %90 = vector.extract_strided_slice %12 {offsets = [0, 16], sizes = [8, 8], strides = [1, 1]} : vector<8x32xbf16> to vector<8x8xbf16>
    %cst_60 = arith.constant dense<0.000000e+00> : vector<8x8xf32>
    %91 = tpu.matmul %88, %89, %cst_60 {dimension_numbers = #tpu.dot_dimension_numbers<[1], [1], [0], [0], [0, 0, 1, 0], [], []>} : vector<8x8xbf16>, vector<8x8xbf16>, vector<8x8xf32> -> vector<8x8xf32>
    %cst_61 = arith.constant -1.000000e+20 : f32
    %92 = vector.broadcast %cst_61 : f32 to vector<8x8xf32>
    %93 = arith.select %17, %92, %91 : vector<8x8xi1>, vector<8x8xf32>
    %c2 = arith.constant 2 : index
    %c0_62 = arith.constant 0 : index
    %c0_63 = arith.constant 0 : index
    %94 = vector.load %arg14[%c2, %c0_62, %c0_63] : memref<4x8x1xf32, #tpu.memory_space<vmem>>, vector<1x8x1xf32>
    %95 = vector.shape_cast %94 : vector<1x8x1xf32> to vector<8x1xf32>
    %cst_64 = arith.constant dense<0xFF800000> : vector<8xf32>
    %96 = vector.multi_reduction <maximumf>, %93, %cst_64 [1] : vector<8x8xf32> to vector<8xf32>
    %97 = vector.shape_cast %96 : vector<8xf32> to vector<8x1xf32>
    %98 = arith.maximumf %95, %97 : vector<8x1xf32>
    %99 = arith.subf %95, %98 : vector<8x1xf32>
    %100 = math.exp %99 : vector<8x1xf32>
    %101 = vector.broadcast %98 : vector<8x1xf32> to vector<8x8xf32>
    %102 = arith.subf %93, %101 : vector<8x8xf32>
    %103 = math.exp %102 : vector<8x8xf32>
    %c2_65 = arith.constant 2 : index
    %c0_66 = arith.constant 0 : index
    %c0_67 = arith.constant 0 : index
    %104 = vector.load %arg15[%c2_65, %c0_66, %c0_67] : memref<4x8x1xf32, #tpu.memory_space<vmem>>, vector<1x8x1xf32>
    %105 = vector.shape_cast %104 : vector<1x8x1xf32> to vector<8x1xf32>
    %106 = arith.mulf %100, %105 : vector<8x1xf32>
    %cst_68 = arith.constant dense<0.000000e+00> : vector<8xf32>
    %107 = vector.multi_reduction <add>, %103, %cst_68 [1] : vector<8x8xf32> to vector<8xf32>
    %108 = vector.shape_cast %107 : vector<8xf32> to vector<8x1xf32>
    %109 = arith.addf %106, %108 : vector<8x1xf32>
    %c2_69 = arith.constant 2 : index
    %c0_70 = arith.constant 0 : index
    %c0_71 = arith.constant 0 : index
    %110 = vector.load %arg15[%c2_69, %c0_70, %c0_71] : memref<4x8x1xf32, #tpu.memory_space<vmem>>, vector<1x8x1xf32>
    %111 = vector.shape_cast %110 : vector<1x8x1xf32> to vector<8x1xf32>
    %112 = vector.shape_cast %109 : vector<8x1xf32> to vector<1x8x1xf32>
    tpu.vector_store %arg15[%c2_69, %c0_70, %c0_71], %112 {strides = array<i32>} : memref<4x8x1xf32, #tpu.memory_space<vmem>>, vector<1x8x1xf32>,
    %c2_72 = arith.constant 2 : index
    %c0_73 = arith.constant 0 : index
    %c0_74 = arith.constant 0 : index
    %113 = vector.load %arg14[%c2_72, %c0_73, %c0_74] : memref<4x8x1xf32, #tpu.memory_space<vmem>>, vector<1x8x1xf32>
    %114 = vector.shape_cast %113 : vector<1x8x1xf32> to vector<8x1xf32>
    %115 = vector.shape_cast %98 : vector<8x1xf32> to vector<1x8x1xf32>
    tpu.vector_store %arg14[%c2_72, %c0_73, %c0_74], %115 {strides = array<i32>} : memref<4x8x1xf32, #tpu.memory_space<vmem>>, vector<1x8x1xf32>,
    %c0_75 = arith.constant 0 : index
    %c16_76 = arith.constant 16 : index
    %116 = vector.load %arg16[%c0_75, %c16_76] : memref<8x32xf32, #tpu.memory_space<vmem>>, vector<8x8xf32>
    %117 = vector.broadcast %100 : vector<8x1xf32> to vector<8x8xf32>
    %118 = arith.mulf %117, %116 : vector<8x8xf32>
    %119 = arith.truncf %103 : vector<8x8xf32> to vector<8x8xbf16>
    %cst_77 = arith.constant dense<0.000000e+00> : vector<8x8xf32>
    %120 = tpu.matmul %119, %90, %cst_77 {dimension_numbers = #tpu.dot_dimension_numbers<[1], [0], [0], [1], [0, 0, 1, 1], [], []>} : vector<8x8xbf16>, vector<8x8xbf16>, vector<8x8xf32> -> vector<8x8xf32>
    %121 = arith.addf %118, %120 : vector<8x8xf32>
    %c0_78 = arith.constant 0 : index
    %c16_79 = arith.constant 16 : index
    %122 = vector.load %arg16[%c0_78, %c16_79] : memref<8x32xf32, #tpu.memory_space<vmem>>, vector<8x8xf32>
    tpu.vector_store %arg16[%c0_78, %c16_79], %121 {strides = array<i32>} : memref<8x32xf32, #tpu.memory_space<vmem>>, vector<8x8xf32>,
    %c0_80 = arith.constant 0 : index
    %c24 = arith.constant 24 : index
    %123 = vector.load %arg13[%c0_80, %c24] : memref<8x32xbf16, #tpu.memory_space<vmem>>, vector<8x8xbf16>
    %124 = vector.extract_strided_slice %7 {offsets = [0, 24], sizes = [8, 8], strides = [1, 1]} : vector<8x32xbf16> to vector<8x8xbf16>
    %125 = vector.extract_strided_slice %12 {offsets = [0, 24], sizes = [8, 8], strides = [1, 1]} : vector<8x32xbf16> to vector<8x8xbf16>
    %cst_81 = arith.constant dense<0.000000e+00> : vector<8x8xf32>
    %126 = tpu.matmul %123, %124, %cst_81 {dimension_numbers = #tpu.dot_dimension_numbers<[1], [1], [0], [0], [0, 0, 1, 0], [], []>} : vector<8x8xbf16>, vector<8x8xbf16>, vector<8x8xf32> -> vector<8x8xf32>
    %cst_82 = arith.constant -1.000000e+20 : f32
    %127 = vector.broadcast %cst_82 : f32 to vector<8x8xf32>
    %128 = arith.select %17, %127, %126 : vector<8x8xi1>, vector<8x8xf32>
    %c3 = arith.constant 3 : index
    %c0_83 = arith.constant 0 : index
    %c0_84 = arith.constant 0 : index
    %129 = vector.load %arg14[%c3, %c0_83, %c0_84] : memref<4x8x1xf32, #tpu.memory_space<vmem>>, vector<1x8x1xf32>
    %130 = vector.shape_cast %129 : vector<1x8x1xf32> to vector<8x1xf32>
    %cst_85 = arith.constant dense<0xFF800000> : vector<8xf32>
    %131 = vector.multi_reduction <maximumf>, %128, %cst_85 [1] : vector<8x8xf32> to vector<8xf32>
    %132 = vector.shape_cast %131 : vector<8xf32> to vector<8x1xf32>
    %133 = arith.maximumf %130, %132 : vector<8x1xf32>
    %134 = arith.subf %130, %133 : vector<8x1xf32>
    %135 = math.exp %134 : vector<8x1xf32>
    %136 = vector.broadcast %133 : vector<8x1xf32> to vector<8x8xf32>
    %137 = arith.subf %128, %136 : vector<8x8xf32>
    %138 = math.exp %137 : vector<8x8xf32>
    %c3_86 = arith.constant 3 : index
    %c0_87 = arith.constant 0 : index
    %c0_88 = arith.constant 0 : index
    %139 = vector.load %arg15[%c3_86, %c0_87, %c0_88] : memref<4x8x1xf32, #tpu.memory_space<vmem>>, vector<1x8x1xf32>
    %140 = vector.shape_cast %139 : vector<1x8x1xf32> to vector<8x1xf32>
    %141 = arith.mulf %135, %140 : vector<8x1xf32>
    %cst_89 = arith.constant dense<0.000000e+00> : vector<8xf32>
    %142 = vector.multi_reduction <add>, %138, %cst_89 [1] : vector<8x8xf32> to vector<8xf32>
    %143 = vector.shape_cast %142 : vector<8xf32> to vector<8x1xf32>
    %144 = arith.addf %141, %143 : vector<8x1xf32>
    %c3_90 = arith.constant 3 : index
    %c0_91 = arith.constant 0 : index
    %c0_92 = arith.constant 0 : index
    %145 = vector.load %arg15[%c3_90, %c0_91, %c0_92] : memref<4x8x1xf32, #tpu.memory_space<vmem>>, vector<1x8x1xf32>
    %146 = vector.shape_cast %145 : vector<1x8x1xf32> to vector<8x1xf32>
    %147 = vector.shape_cast %144 : vector<8x1xf32> to vector<1x8x1xf32>
    tpu.vector_store %arg15[%c3_90, %c0_91, %c0_92], %147 {strides = array<i32>} : memref<4x8x1xf32, #tpu.memory_space<vmem>>, vector<1x8x1xf32>,
    %c3_93 = arith.constant 3 : index
    %c0_94 = arith.constant 0 : index
    %c0_95 = arith.constant 0 : index
    %148 = vector.load %arg14[%c3_93, %c0_94, %c0_95] : memref<4x8x1xf32, #tpu.memory_space<vmem>>, vector<1x8x1xf32>
    %149 = vector.shape_cast %148 : vector<1x8x1xf32> to vector<8x1xf32>
    %150 = vector.shape_cast %133 : vector<8x1xf32> to vector<1x8x1xf32>
    tpu.vector_store %arg14[%c3_93, %c0_94, %c0_95], %150 {strides = array<i32>} : memref<4x8x1xf32, #tpu.memory_space<vmem>>, vector<1x8x1xf32>,
    %c0_96 = arith.constant 0 : index
    %c24_97 = arith.constant 24 : index
    %151 = vector.load %arg16[%c0_96, %c24_97] : memref<8x32xf32, #tpu.memory_space<vmem>>, vector<8x8xf32>
    %152 = vector.broadcast %135 : vector<8x1xf32> to vector<8x8xf32>
    %153 = arith.mulf %152, %151 : vector<8x8xf32>
    %154 = arith.truncf %138 : vector<8x8xf32> to vector<8x8xbf16>
    %cst_98 = arith.constant dense<0.000000e+00> : vector<8x8xf32>
    %155 = tpu.matmul %154, %125, %cst_98 {dimension_numbers = #tpu.dot_dimension_numbers<[1], [0], [0], [1], [0, 0, 1, 1], [], []>} : vector<8x8xbf16>, vector<8x8xbf16>, vector<8x8xf32> -> vector<8x8xf32>
    %156 = arith.addf %153, %155 : vector<8x8xf32>
    %c0_99 = arith.constant 0 : index
    %c24_100 = arith.constant 24 : index
    %157 = vector.load %arg16[%c0_99, %c24_100] : memref<8x32xf32, #tpu.memory_space<vmem>>, vector<8x8xf32>
    tpu.vector_store %arg16[%c0_99, %c24_100], %156 {strides = array<i32>} : memref<8x32xf32, #tpu.memory_space<vmem>>, vector<8x8xf32>,
    %c0_i32_101 = arith.constant 0 : i32
    %158 = arith.cmpi eq, %arg2, %c0_i32_101 : i32
    %159 = arith.extui %158 : i1 to i32
    %c0_i32_102 = arith.constant 0 : i32
    %160 = arith.cmpi ne, %159, %c0_i32_102 : i32
    scf.if %160 {
      %c0_103 = arith.constant 0 : index
      %c0_104 = arith.constant 0 : index
      %c0_105 = arith.constant 0 : index
      %161 = vector.load %arg15[%c0_103, %c0_104, %c0_105] : memref<4x8x1xf32, #tpu.memory_space<vmem>>, vector<1x8x1xf32>
      %162 = vector.shape_cast %161 : vector<1x8x1xf32> to vector<8x1xf32>
      %163 = tpu.reciprocal %162 {approx = true} : vector<8x1xf32> -> vector<8x1xf32>
      %c0_106 = arith.constant 0 : index
      %c0_107 = arith.constant 0 : index
      %164 = vector.load %arg16[%c0_106, %c0_107] : memref<8x32xf32, #tpu.memory_space<vmem>>, vector<8x8xf32>
      %165 = vector.broadcast %163 : vector<8x1xf32> to vector<8x8xf32>
      %166 = arith.mulf %164, %165 : vector<8x8xf32>
      %c1_108 = arith.constant 1 : index
      %c0_109 = arith.constant 0 : index
      %c0_110 = arith.constant 0 : index
      %167 = vector.load %arg15[%c1_108, %c0_109, %c0_110] : memref<4x8x1xf32, #tpu.memory_space<vmem>>, vector<1x8x1xf32>
      %168 = vector.shape_cast %167 : vector<1x8x1xf32> to vector<8x1xf32>
      %169 = tpu.reciprocal %168 {approx = true} : vector<8x1xf32> -> vector<8x1xf32>
      %c0_111 = arith.constant 0 : index
      %c8_112 = arith.constant 8 : index
      %170 = vector.load %arg16[%c0_111, %c8_112] : memref<8x32xf32, #tpu.memory_space<vmem>>, vector<8x8xf32>
      %171 = vector.broadcast %169 : vector<8x1xf32> to vector<8x8xf32>
      %172 = arith.mulf %170, %171 : vector<8x8xf32>
      %c2_113 = arith.constant 2 : index
      %c0_114 = arith.constant 0 : index
      %c0_115 = arith.constant 0 : index
      %173 = vector.load %arg15[%c2_113, %c0_114, %c0_115] : memref<4x8x1xf32, #tpu.memory_space<vmem>>, vector<1x8x1xf32>
      %174 = vector.shape_cast %173 : vector<1x8x1xf32> to vector<8x1xf32>
      %175 = tpu.reciprocal %174 {approx = true} : vector<8x1xf32> -> vector<8x1xf32>
      %c0_116 = arith.constant 0 : index
      %c16_117 = arith.constant 16 : index
      %176 = vector.load %arg16[%c0_116, %c16_117] : memref<8x32xf32, #tpu.memory_space<vmem>>, vector<8x8xf32>
      %177 = vector.broadcast %175 : vector<8x1xf32> to vector<8x8xf32>
      %178 = arith.mulf %176, %177 : vector<8x8xf32>
      %c3_118 = arith.constant 3 : index
      %c0_119 = arith.constant 0 : index
      %c0_120 = arith.constant 0 : index
      %179 = vector.load %arg15[%c3_118, %c0_119, %c0_120] : memref<4x8x1xf32, #tpu.memory_space<vmem>>, vector<1x8x1xf32>
      %180 = vector.shape_cast %179 : vector<1x8x1xf32> to vector<8x1xf32>
      %181 = tpu.reciprocal %180 {approx = true} : vector<8x1xf32> -> vector<8x1xf32>
      %c0_121 = arith.constant 0 : index
      %c24_122 = arith.constant 24 : index
      %182 = vector.load %arg16[%c0_121, %c24_122] : memref<8x32xf32, #tpu.memory_space<vmem>>, vector<8x8xf32>
      %183 = vector.broadcast %181 : vector<8x1xf32> to vector<8x8xf32>
      %184 = arith.mulf %182, %183 : vector<8x8xf32>
      %185 = tpu.concatenate %166, %172, %178, %184 in 1 : vector<8x8xf32>, vector<8x8xf32>, vector<8x8xf32>, vector<8x8xf32> -> vector<8x32xf32>
      %186 = arith.truncf %185 : vector<8x32xf32> to vector<8x32xbf16>
      %c0_123 = arith.constant 0 : index
      %c0_124 = arith.constant 0 : index
      %187 = vector.load %arg10[%c0_123, %c0_124] : memref<32x32xbf16, #tpu.memory_space<vmem>>, vector<32x32xbf16>
      %cst_125 = arith.constant dense<0.000000e+00> : vector<8x32xf32>
      %188 = tpu.matmul %186, %187, %cst_125 {dimension_numbers = #tpu.dot_dimension_numbers<[1], [0], [0], [1], [0, 0, 1, 1], [], []>} : vector<8x32xbf16>, vector<32x32xbf16>, vector<8x32xf32> -> vector<8x32xf32>
      %c0_126 = arith.constant 0 : index
      %c0_127 = arith.constant 0 : index
      %189 = vector.load %arg11[%c0_126, %c0_127] : memref<1x32xf32, #tpu.memory_space<vmem>>, vector<1x32xf32>
      %190 = vector.broadcast %189 : vector<1x32xf32> to vector<8x32xf32>
      %191 = arith.addf %188, %190 : vector<8x32xf32>
      %c0_128 = arith.constant 0 : index
      %c0_129 = arith.constant 0 : index
      %c0_130 = arith.constant 0 : index
      %192 = vector.load %arg12[%c0_128, %c0_129, %c0_130] : memref<1x8x32xf32, #tpu.memory_space<vmem>>, vector<1x8x32xf32>
      %193 = vector.shape_cast %192 : vector<1x8x32xf32> to vector<8x32xf32>
      %194 = vector.shape_cast %191 : vector<8x32xf32> to vector<1x8x32xf32>
      tpu.vector_store %arg12[%c0_128, %c0_129, %c0_130], %194 {strides = array<i32>} : memref<1x8x32xf32, #tpu.memory_space<vmem>>, vector<1x8x32xf32>,
    } else {
    }
    return
  }
  func.func @transform_0(%arg0: i32, %arg1: i32, %arg2: i32) -> (i32, i32, i32) {
    %c0_i32 = arith.constant 0 : i32
    %c0_i32_0 = arith.constant 0 : i32
    return %arg0, %arg1, %c0_i32 : i32, i32, i32
  }
  func.func @transform_1(%arg0: i32, %arg1: i32, %arg2: i32) -> (i32, i32, i32) {
    %c0_i32 = arith.constant 0 : i32
    %c0_i32_0 = arith.constant 0 : i32
    return %arg0, %arg2, %c0_i32 : i32, i32, i32
  }
  func.func @transform_2(%arg0: i32, %arg1: i32, %arg2: i32) -> (i32, i32, i32) {
    %c0_i32 = arith.constant 0 : i32
    %c0_i32_0 = arith.constant 0 : i32
    return %arg0, %arg2, %c0_i32 : i32, i32, i32
  }
  func.func @transform_3(%arg0: i32, %arg1: i32, %arg2: i32) -> (i32, i32, i32) {
    %c0_i32 = arith.constant 0 : i32
    return %arg0, %arg1, %arg2 : i32, i32, i32
  }
  func.func @transform_4(%arg0: i32, %arg1: i32, %arg2: i32) -> (i32, i32) {
    %c0_i32 = arith.constant 0 : i32
    %c0_i32_0 = arith.constant 0 : i32
    %c0_i32_1 = arith.constant 0 : i32
    return %c0_i32, %c0_i32_0 : i32, i32
  }
  func.func @transform_5(%arg0: i32, %arg1: i32, %arg2: i32) -> (i32, i32) {
    %c0_i32 = arith.constant 0 : i32
    %c0_i32_0 = arith.constant 0 : i32
    %c0_i32_1 = arith.constant 0 : i32
    return %c0_i32, %c0_i32_0 : i32, i32
  }
  func.func @transform_6(%arg0: i32, %arg1: i32, %arg2: i32) -> (i32, i32) {
    %c0_i32 = arith.constant 0 : i32
    %c0_i32_0 = arith.constant 0 : i32
    %c0_i32_1 = arith.constant 0 : i32
    return %c0_i32, %c0_i32_0 : i32, i32
  }
  func.func @transform_7(%arg0: i32, %arg1: i32, %arg2: i32) -> (i32, i32) {
    %c0_i32 = arith.constant 0 : i32
    %c0_i32_0 = arith.constant 0 : i32
    %c0_i32_1 = arith.constant 0 : i32
    return %c0_i32, %c0_i32_0 : i32, i32
  }
  func.func @transform_8(%arg0: i32, %arg1: i32, %arg2: i32) -> (i32, i32) {
    %c0_i32 = arith.constant 0 : i32
    %c0_i32_0 = arith.constant 0 : i32
    %c0_i32_1 = arith.constant 0 : i32
    return %c0_i32, %c0_i32_0 : i32, i32
  }
  func.func @transform_9(%arg0: i32, %arg1: i32, %arg2: i32) -> (i32, i32, i32) {
    %c0_i32 = arith.constant 0 : i32
    %c0_i32_0 = arith.constant 0 : i32
    return %arg0, %arg1, %c0_i32 : i32, i32, i32
  }
}

</mosaic_0001>

<llo_original>
// kernel: tpu_custom_call.1
$region0: #{tpu_custom_call.1}
  #allocation0 [shape = 'u32[]', space=smem, size = 0x4, offset = 0x4, fixed_abs, tag = 'smem constant byte address 0x4 - core index']
  #allocation1 [shape = 'u32[144,128]{1,0:T(1,128)}', space=vmem, size = 0x12000, scoped, tag = 'internal scratch']
  #allocation2 [shape = 'bf16[8,32]{1,0:T(8,128)(2,1)}', space=vmem, size = 0x800, scoped, tag = 'scratch operand']
  #allocation3 [shape = 'f32[4,8,1]{2,1,0:T(8,128)}', space=vmem, size = 0x4000, scoped, tag = 'scratch operand']
  #allocation4 [shape = 'f32[4,8,1]{2,1,0:T(8,128)}', space=vmem, size = 0x4000, scoped, tag = 'scratch operand']
  #allocation5 [shape = 'f32[8,32]{1,0:T(8,128)}', space=vmem, size = 0x1000, scoped, tag = 'scratch operand']
  %s0 = inlined_call_operand.hbm [shape: bf16[2,8,32], index: 0, kind: input, shape index: {}]
  %s1 = inlined_call_operand.hbm [shape: bf16[2,8,32], index: 1, kind: input, shape index: {}]
  %s2 = inlined_call_operand.hbm [shape: bf16[2,8,32], index: 2, kind: input, shape index: {}]
  %s3 = inlined_call_operand.vmem [shape: s8[2,8,8], index: 3, kind: input, shape index: {}]
  %s4 = inlined_call_operand.hbm [shape: bf16[32,32], index: 4, kind: input, shape index: {}]
  %s5 = inlined_call_operand.hbm [shape: bf16[32,32], index: 5, kind: input, shape index: {}]
  %s6 = inlined_call_operand.hbm [shape: bf16[32,32], index: 6, kind: input, shape index: {}]
  %s7 = inlined_call_operand.hbm [shape: bf16[32,32], index: 7, kind: input, shape index: {}]
  %s8 = inlined_call_operand.vmem [shape: f32[1,32], index: 8, kind: input, shape index: {}]
  %s9 = inlined_call_operand.hbm [shape: f32[2,8,32], index: 9, kind: output, shape index: {}]
  %s10 = sld [smem:[#allocation0]]
  $region105: #{tpu_custom_call.1} parent=0
    _
  %s12 = ssub.s32 1, %s10
  %s13 = scalar_select 0, %s12, %s10
  $region1: #{tpu_custom_call.1} parent=0
    #allocation6 [shape = 'u8[4096]{0}', space=vmem, size = 0x1000, scoped, tag = 'input window, operand 0']
    #allocation7 [shape = 's32[2]{0}', space=sflag, size = 0x8, scoped, tag = 'scoped memory for tpu_custom_call.1']
    #allocation8 [shape = 's32[2]{0}', space=sflag, size = 0x8, scoped, tag = 'scoped memory for tpu_custom_call.1']
    #allocation9 [shape = 'u8[4096]{0}', space=vmem, size = 0x1000, scoped, tag = 'input window, operand 1']
    #allocation10 [shape = 's32[2]{0}', space=sflag, size = 0x8, scoped, tag = 'scoped memory for tpu_custom_call.1']
    #allocation11 [shape = 'u8[4096]{0}', space=vmem, size = 0x1000, scoped, tag = 'input window, operand 2']
    #allocation12 [shape = 'u8[8192]{0}', space=vmem, size = 0x2000, scoped, tag = 'input window, operand 4, single buffered']
    #allocation13 [shape = 's32[1]{0}', space=sflag, size = 0x4, scoped, tag = 'scoped memory for tpu_custom_call.1']
    #allocation14 [shape = 'u8[8192]{0}', space=vmem, size = 0x2000, scoped, tag = 'input window, operand 5, single buffered']
    #allocation15 [shape = 'u8[8192]{0}', space=vmem, size = 0x2000, scoped, tag = 'input window, operand 6, single buffered']
    #allocation16 [shape = 's32[1]{0}', space=sflag, size = 0x4, scoped, tag = 'scoped memory for tpu_custom_call.1']
    #allocation17 [shape = 'u8[8192]{0}', space=vmem, size = 0x2000, scoped, tag = 'input window, operand 7, single buffered']
    #allocation18 [shape = 'u8[8192]{0}', space=vmem, size = 0x2000, scoped, tag = 'output window, operand 0']
    %14 = vsyncpa [#allocation7], 0
    %s15 = scalar_lea.sflag [#allocation7], 1
    %16 = vsyncpa %s15, 0
    %17 = vsyncpa [#allocation10], 0
    %s18 = scalar_lea.sflag [#allocation10], 1
    %19 = vsyncpa %s18, 0
    %20 = vsyncpa [#allocation13], 0
    %21 = vsyncpa [#allocation16], 0
    %22 = vsyncpa [#allocation8], 0
    %s23 = scalar_lea.sflag [#allocation8], 1
    %24 = vsyncpa %s23, 0
    loop: start=0, step=1, limit=4
    $region2: #{tpu_custom_call.1} parent=1 // loop_pre_header
      _
    $region3: #{tpu_custom_call.1} parent=1 // loop_header
      %s26 = sphi 0, %s30
      %p27 = scmp.ge.s32.totalorder %s26, 4
      %s33 = sphi 0, %s52
      %s34 = sphi 0, %s48
      %s35 = sphi 0, %s44
      %s36 = sphi 0, %s33
      %s37 = sphi 0, %s34
      %s38 = sphi 0, %s35
      %s39 = sphi 0, %s36
      %s40 = sphi 0, %s37
      %s41 = sphi 0, %s38
      %s57 = sphi 0, %s59
      %s60 = sphi 0, %s57
      %s61 = sphi 0, %s60
      %s77 = sphi 0, %s61
      %s85 = sphi 0, %s87
      %s88 = sphi 0, %s85
      %s89 = sphi 0, %s88
      %s105 = sphi 0, %s89
      %s113 = sphi 0, %s115
      %s116 = sphi 0, %s113
      %s117 = sphi 0, %s116
      %s133 = sphi 0, %s117
      %s143 = sphi 0, %s145
      %s146 = sphi 0, %s143
      %s147 = sphi 0, %s146
      %s163 = sphi 0, %s147
      %s167 = sphi 0, %s167
      %s169 = sphi 0, %s167
      %s170 = sphi 0, %s169
      %s184 = sphi 0, %s170
      %s188 = sphi 0, %s188
      %s190 = sphi 0, %s188
      %s191 = sphi 0, %s190
      %s205 = sphi 0, %s191
      %s209 = sphi 0, %s209
      %s211 = sphi 0, %s209
      %s212 = sphi 0, %s211
      %s226 = sphi 0, %s212
      %s230 = sphi 0, %s230
      %s232 = sphi 0, %s230
      %s233 = sphi 0, %s232
      %s247 = sphi 0, %s233
      %s251 = sphi 0, %s251
      %s253 = sphi 0, %s251
      %s254 = sphi 0, %s253
      %s268 = sphi 0, %s254
      %s276 = sphi 0, %s278
      %s279 = sphi 0, %s276
      %s280 = sphi 0, %s279
      %s296 = sphi 0, %s280
    $region4: #{tpu_custom_call.1} parent=1 // loop_header_branch
      %29 = sbr.rel (%p27) target = $region8
    $region5: #{tpu_custom_call.1} parent=1 // loop_body
      %s31 = ssub.s32 %s26, 1
      %s32 = ssub.s32 %s26, 2
      %s42 = sadd.s32 1, %s35
      %p43 = scmp.ge.s32.totalorder %s42, 1
      %s44 = scalar_select %p43, 0, %s42
      %s45 = sadd.s32 1, %s34
      %s46 = scalar_select %p43, %s45, %s34
      %p47 = scmp.ge.s32.totalorder %s46, 1
      %s48 = scalar_select %p47, 0, %s46
      %s49 = sadd.s32 1, %s33
      %s50 = scalar_select %p47, %s49, %s33
      %p51 = scmp.ge.s32.totalorder %s50, 2
      %s52 = scalar_select %p51, 0, %s50
      %s53 = ssub.s32 %s33, %s52
      %s54 = ssub.s32 %s34, %s48
      %s55 = sor.u32 %s53, %s54
      %p56 = scmp.eq.s32.totalorder %s55, 0
      %s58 = sadd.s32 %s57, 1
      %s59 = scalar_select %p56, %s57, %s58
      %p62 = pneg %p56
      %p63 = scmp.eq.s32.totalorder %s26, 1
      %p64 = por %p62, %p63
      %p65 = scmp.ne.s32.totalorder %s57, %s60
      %p66 = scmp.eq.s32.totalorder %s26, 0
      %p67 = por %p65, %p66
      %p68 = scmp.ne.s32.totalorder %s57, %s60
      %p69 = scmp.eq.s32.totalorder %s31, 1
      %p70 = por %p68, %p69
      %p71 = scmp.ne.s32.totalorder %s60, %s61
      %p72 = scmp.eq.s32.totalorder %s31, 0
      %p73 = por %p71, %p72
      %p74 = scmp.ne.s32.totalorder %s60, %s61
      %p75 = scmp.eq.s32.totalorder %s32, 1
      %p76 = por %p74, %p75
      %p78 = scmp.ne.s32.totalorder %s61, %s77
      %p79 = scmp.eq.s32.totalorder %s32, 0
      %p80 = por %p78, %p79
      %s81 = ssub.s32 %s33, %s52
      %s82 = ssub.s32 %s35, %s44
      %s83 = sor.u32 %s81, %s82
      %p84 = scmp.eq.s32.totalorder %s83, 0
      %s86 = sadd.s32 %s85, 1
      %s87 = scalar_select %p84, %s85, %s86
      %p90 = pneg %p84
      %p91 = scmp.eq.s32.totalorder %s26, 1
      %p92 = por %p90, %p91
      %p93 = scmp.ne.s32.totalorder %s85, %s88
      %p94 = scmp.eq.s32.totalorder %s26, 0
      %p95 = por %p93, %p94
      %p96 = scmp.ne.s32.totalorder %s85, %s88
      %p97 = scmp.eq.s32.totalorder %s31, 1
      %p98 = por %p96, %p97
      %p99 = scmp.ne.s32.totalorder %s88, %s89
      %p100 = scmp.eq.s32.totalorder %s31, 0
      %p101 = por %p99, %p100
      %p102 = scmp.ne.s32.totalorder %s88, %s89
      %p103 = scmp.eq.s32.totalorder %s32, 1
      %p104 = por %p102, %p103
      %p106 = scmp.ne.s32.totalorder %s89, %s105
      %p107 = scmp.eq.s32.totalorder %s32, 0
      %p108 = por %p106, %p107
      %s109 = ssub.s32 %s33, %s52
      %s110 = ssub.s32 %s35, %s44
      %s111 = sor.u32 %s109, %s110
      %p112 = scmp.eq.s32.totalorder %s111, 0
      %s114 = sadd.s32 %s113, 1
      %s115 = scalar_select %p112, %s113, %s114
      %p118 = pneg %p112
      %p119 = scmp.eq.s32.totalorder %s26, 1
      %p120 = por %p118, %p119
      %p121 = scmp.ne.s32.totalorder %s113, %s116
      %p122 = scmp.eq.s32.totalorder %s26, 0
      %p123 = por %p121, %p122
      %p124 = scmp.ne.s32.totalorder %s113, %s116
      %p125 = scmp.eq.s32.totalorder %s31, 1
      %p126 = por %p124, %p125
      %p127 = scmp.ne.s32.totalorder %s116, %s117
      %p128 = scmp.eq.s32.totalorder %s31, 0
      %p129 = por %p127, %p128
      %p130 = scmp.ne.s32.totalorder %s116, %s117
      %p131 = scmp.eq.s32.totalorder %s32, 1
      %p132 = por %p130, %p131
      %p134 = scmp.ne.s32.totalorder %s117, %s133
      %p135 = scmp.eq.s32.totalorder %s32, 0
      %p136 = por %p134, %p135
      %s137 = ssub.s32 %s33, %s52
      %s138 = ssub.s32 %s34, %s48
      %s139 = sor.u32 %s137, %s138
      %s140 = ssub.s32 %s35, %s44
      %s141 = sor.u32 %s139, %s140
      %p142 = scmp.eq.s32.totalorder %s141, 0
      %s144 = sadd.s32 %s143, 1
      %s145 = scalar_select %p142, %s143, %s144
      %p148 = pneg %p142
      %p149 = scmp.eq.s32.totalorder %s26, 1
      %p150 = por %p148, %p149
      %p151 = scmp.ne.s32.totalorder %s143, %s146
      %p152 = scmp.eq.s32.totalorder %s26, 0
      %p153 = por %p151, %p152
      %p154 = scmp.ne.s32.totalorder %s143, %s146
      %p155 = scmp.eq.s32.totalorder %s31, 1
      %p156 = por %p154, %p155
      %p157 = scmp.ne.s32.totalorder %s146, %s147
      %p158 = scmp.eq.s32.totalorder %s31, 0
      %p159 = por %p157, %p158
      %p160 = scmp.ne.s32.totalorder %s146, %s147
      %p161 = scmp.eq.s32.totalorder %s32, 1
      %p162 = por %p160, %p161
      %p164 = scmp.ne.s32.totalorder %s147, %s163
      %p165 = scmp.eq.s32.totalorder %s32, 0
      %p166 = por %p164, %p165
      %s168 = sadd.s32 %s167, 1
      %p171 = scmp.eq.s32.totalorder %s26, 1
      %p172 = scmp.ne.s32.totalorder %s167, %s169
      %p173 = scmp.eq.s32.totalorder %s26, 0
      %p174 = por %p172, %p173
      %p175 = scmp.ne.s32.totalorder %s167, %s169
      %p176 = scmp.eq.s32.totalorder %s31, 1
      %p177 = por %p175, %p176
      %p178 = scmp.ne.s32.totalorder %s169, %s170
      %p179 = scmp.eq.s32.totalorder %s31, 0
      %p180 = por %p178, %p179
      %p181 = scmp.ne.s32.totalorder %s169, %s170
      %p182 = scmp.eq.s32.totalorder %s32, 1
      %p183 = por %p181, %p182
      %p185 = scmp.ne.s32.totalorder %s170, %s184
      %p186 = scmp.eq.s32.totalorder %s32, 0
      %p187 = por %p185, %p186
      %s189 = sadd.s32 %s188, 1
      %p192 = scmp.eq.s32.totalorder %s26, 1
      %p193 = scmp.ne.s32.totalorder %s188, %s190
      %p194 = scmp.eq.s32.totalorder %s26, 0
      %p195 = por %p193, %p194
      %p196 = scmp.ne.s32.totalorder %s188, %s190
      %p197 = scmp.eq.s32.totalorder %s31, 1
      %p198 = por %p196, %p197
      %p199 = scmp.ne.s32.totalorder %s190, %s191
      %p200 = scmp.eq.s32.totalorder %s31, 0
      %p201 = por %p199, %p200
      %p202 = scmp.ne.s32.totalorder %s190, %s191
      %p203 = scmp.eq.s32.totalorder %s32, 1
      %p204 = por %p202, %p203
      %p206 = scmp.ne.s32.totalorder %s191, %s205
      %p207 = scmp.eq.s32.totalorder %s32, 0
      %p208 = por %p206, %p207
      %s210 = sadd.s32 %s209, 1
      %p213 = scmp.eq.s32.totalorder %s26, 1
      %p214 = scmp.ne.s32.totalorder %s209, %s211
      %p215 = scmp.eq.s32.totalorder %s26, 0
      %p216 = por %p214, %p215
      %p217 = scmp.ne.s32.totalorder %s209, %s211
      %p218 = scmp.eq.s32.totalorder %s31, 1
      %p219 = por %p217, %p218
      %p220 = scmp.ne.s32.totalorder %s211, %s212
      %p221 = scmp.eq.s32.totalorder %s31, 0
      %p222 = por %p220, %p221
      %p223 = scmp.ne.s32.totalorder %s211, %s212
      %p224 = scmp.eq.s32.totalorder %s32, 1
      %p225 = por %p223, %p224
      %p227 = scmp.ne.s32.totalorder %s212, %s226
      %p228 = scmp.eq.s32.totalorder %s32, 0
      %p229 = por %p227, %p228
      %s231 = sadd.s32 %s230, 1
      %p234 = scmp.eq.s32.totalorder %s26, 1
      %p235 = scmp.ne.s32.totalorder %s230, %s232
      %p236 = scmp.eq.s32.totalorder %s26, 0
      %p237 = por %p235, %p236
      %p238 = scmp.ne.s32.totalorder %s230, %s232
      %p239 = scmp.eq.s32.totalorder %s31, 1
      %p240 = por %p238, %p239
      %p241 = scmp.ne.s32.totalorder %s232, %s233
      %p242 = scmp.eq.s32.totalorder %s31, 0
      %p243 = por %p241, %p242
      %p244 = scmp.ne.s32.totalorder %s232, %s233
      %p245 = scmp.eq.s32.totalorder %s32, 1
      %p246 = por %p244, %p245
      %p248 = scmp.ne.s32.totalorder %s233, %s247
      %p249 = scmp.eq.s32.totalorder %s32, 0
      %p250 = por %p248, %p249
      %s252 = sadd.s32 %s251, 1
      %p255 = scmp.eq.s32.totalorder %s26, 1
      %p256 = scmp.ne.s32.totalorder %s251, %s253
      %p257 = scmp.eq.s32.totalorder %s26, 0
      %p258 = por %p256, %p257
      %p259 = scmp.ne.s32.totalorder %s251, %s253
      %p260 = scmp.eq.s32.totalorder %s31, 1
      %p261 = por %p259, %p260
      %p262 = scmp.ne.s32.totalorder %s253, %s254
      %p263 = scmp.eq.s32.totalorder %s31, 0
      %p264 = por %p262, %p263
      %p265 = scmp.ne.s32.totalorder %s253, %s254
      %p266 = scmp.eq.s32.totalorder %s32, 1
      %p267 = por %p265, %p266
      %p269 = scmp.ne.s32.totalorder %s254, %s268
      %p270 = scmp.eq.s32.totalorder %s32, 0
      %p271 = por %p269, %p270
      %s272 = ssub.s32 %s33, %s52
      %s273 = ssub.s32 %s34, %s48
      %s274 = sor.u32 %s272, %s273
      %p275 = scmp.eq.s32.totalorder %s274, 0
      %s277 = sadd.s32 %s276, 1
      %s278 = scalar_select %p275, %s276, %s277
      %p281 = pneg %p275
      %p282 = scmp.eq.s32.totalorder %s26, 1
      %p283 = por %p281, %p282
      %p284 = scmp.ne.s32.totalorder %s276, %s279
      %p285 = scmp.eq.s32.totalorder %s26, 0
      %p286 = por %p284, %p285
      %p287 = scmp.ne.s32.totalorder %s276, %s279
      %p288 = scmp.eq.s32.totalorder %s31, 1
      %p289 = por %p287, %p288
      %p290 = scmp.ne.s32.totalorder %s279, %s280
      %p291 = scmp.eq.s32.totalorder %s31, 0
      %p292 = por %p290, %p291
      %p293 = scmp.ne.s32.totalorder %s279, %s280
      %p294 = scmp.eq.s32.totalorder %s32, 1
      %p295 = por %p293, %p294
      %p297 = scmp.ne.s32.totalorder %s280, %s296
      %p298 = scmp.eq.s32.totalorder %s32, 0
      %p299 = por %p297, %p298
      %p300 = scmp.le.s32.totalorder 1, %s26
      %p301 = scmp.lt.s32.totalorder %s26, 3
      %p302 = pnand %p300, %p301
      %p303 = pneg %p302
      // Predicated region
      $region9: #{tpu_custom_call.1} parent=5 // pred_check
        _
      $region10: #{tpu_custom_call.1} parent=5 // pred_check_branch
        %305 = sbr.rel (%p302) target = $region12
      $region11: #{tpu_custom_call.1} parent=5 // pred_region
        %s306 = ssub.s32 %s26, 1
        // Predicated region
        $region13: #{tpu_custom_call.1} parent=11 // pred_check
          %p307 = pneg %p180
        $region14: #{tpu_custom_call.1} parent=11 // pred_check_branch
          %309 = sbr.rel (%p307) target = $region16
        $region15: #{tpu_custom_call.1} parent=11 // pred_region
          %s311 = ssub.s32 256, 256
          %312 = vsyncadd [#allocation13], %s311
          %s313 = sshll.u32 [#allocation12], 4
          %s314 = int_to_ptr.vmem [resolvable:$true] %s313
          %319 = dma.hbm_to_vmem [thread:$0]  %s4, 256, %s314, [#allocation13], 64, 64, 4
        $region16: #{tpu_custom_call.1} parent=11 // pred_fallthru
          _
        // Predicated region
        $region17: #{tpu_custom_call.1} parent=11 // pred_check
          %p320 = pneg %p201
        $region18: #{tpu_custom_call.1} parent=11 // pred_check_branch
          %322 = sbr.rel (%p320) target = $region20
        $region19: #{tpu_custom_call.1} parent=11 // pred_region
          %s324 = ssub.s32 256, 256
          %325 = vsyncadd [#allocation13], %s324
          %s326 = sshll.u32 [#allocation14], 4
          %s327 = int_to_ptr.vmem [resolvable:$true] %s326
          %332 = dma.hbm_to_vmem [thread:$0]  %s5, 256, %s327, [#allocation13], 64, 64, 4
        $region20: #{tpu_custom_call.1} parent=11 // pred_fallthru
          _
        // Predicated region
        $region21: #{tpu_custom_call.1} parent=11 // pred_check
          %p333 = pneg %p222
        $region22: #{tpu_custom_call.1} parent=11 // pred_check_branch
          %335 = sbr.rel (%p333) target = $region24
        $region23: #{tpu_custom_call.1} parent=11 // pred_region
          %s337 = ssub.s32 256, 256
          %338 = vsyncadd [#allocation16], %s337
          %s339 = sshll.u32 [#allocation15], 4
          %s340 = int_to_ptr.vmem [resolvable:$true] %s339
          %345 = dma.hbm_to_vmem [thread:$0]  %s6, 256, %s340, [#allocation16], 64, 64, 4
        $region24: #{tpu_custom_call.1} parent=11 // pred_fallthru
          _
        // Predicated region
        $region25: #{tpu_custom_call.1} parent=11 // pred_check
          %p346 = pneg %p243
        $region26: #{tpu_custom_call.1} parent=11 // pred_check_branch
          %348 = sbr.rel (%p346) target = $region28
        $region27: #{tpu_custom_call.1} parent=11 // pred_region
          %s350 = ssub.s32 256, 256
          %351 = vsyncadd [#allocation16], %s350
          %s352 = sshll.u32 [#allocation17], 4
          %s353 = int_to_ptr.vmem [resolvable:$true] %s352
          %358 = dma.hbm_to_vmem [thread:$0]  %s7, 256, %s353, [#allocation16], 64, 64, 4
        $region28: #{tpu_custom_call.1} parent=11 // pred_fallthru
          _
        // Predicated region
        $region29: #{tpu_custom_call.1} parent=11 // pred_check
          %p359 = pneg %p264
        $region30: #{tpu_custom_call.1} parent=11 // pred_check_branch
          %361 = sbr.rel (%p359) target = $region32
        $region31: #{tpu_custom_call.1} parent=11 // pred_region
          _
        $region32: #{tpu_custom_call.1} parent=11 // pred_fallthru
          _
      $region12: #{tpu_custom_call.1} parent=5 // pred_fallthru
        _
      %p362 = scmp.lt.s32.totalorder %s26, 2
      // Predicated region
      $region33: #{tpu_custom_call.1} parent=5 // pred_check
        %p363 = pneg %p362
      $region34: #{tpu_custom_call.1} parent=5 // pred_check_branch
        %365 = sbr.rel (%p363) target = $region36
      $region35: #{tpu_custom_call.1} parent=5 // pred_region
        // Predicated region
        $region37: #{tpu_custom_call.1} parent=35 // pred_check
          %p366 = pneg %p67
        $region38: #{tpu_custom_call.1} parent=35 // pred_check_branch
          %368 = sbr.rel (%p366) target = $region40
        $region39: #{tpu_custom_call.1} parent=35 // pred_region
          %s369 = sand.u32 %s57, 1
          %s370 = scalar_lea.sflag [#allocation7], %s369
          %s371 = sand.u32 %s57, 1
          %s372 = smul.addr %s371, 4
          %s373 = scalar_lea.vmem [#allocation6], %s372
          %s375 = ssub.s32 64, 64
          %376 = vsyncadd %s370, %s375
          %s377 = sadd.s32 %s34, %s33
          %s378 = smul.addr %s377, 64
          %s379 = scalar_lea.hbm %s0, %s378
          %s381 = sshll.u32 %s373, 4
          %s382 = int_to_ptr.vmem [resolvable:$true] %s381
          %384 = dma.hbm_to_vmem [thread:$0]  %s379, 64, %s382, %s370
        $region40: #{tpu_custom_call.1} parent=35 // pred_fallthru
          _
        // Predicated region
        $region41: #{tpu_custom_call.1} parent=35 // pred_check
          %p385 = pneg %p95
        $region42: #{tpu_custom_call.1} parent=35 // pred_check_branch
          %387 = sbr.rel (%p385) target = $region44
        $region43: #{tpu_custom_call.1} parent=35 // pred_region
          %s388 = sand.u32 %s26, 1
          %s389 = scalar_lea.sflag [#allocation10], %s388
          %s390 = sand.u32 %s85, 1
          %s391 = smul.addr %s390, 4
          %s392 = scalar_lea.vmem [#allocation9], %s391
          %s394 = ssub.s32 64, 64
          %395 = vsyncadd %s389, %s394
          %s396 = sadd.s32 %s35, %s33
          %s397 = smul.addr %s396, 64
          %s398 = scalar_lea.hbm %s1, %s397
          %s400 = sshll.u32 %s392, 4
          %s401 = int_to_ptr.vmem [resolvable:$true] %s400
          %403 = dma.hbm_to_vmem [thread:$0]  %s398, 64, %s401, %s389
        $region44: #{tpu_custom_call.1} parent=35 // pred_fallthru
          _
        // Predicated region
        $region45: #{tpu_custom_call.1} parent=35 // pred_check
          %p404 = pneg %p123
        $region46: #{tpu_custom_call.1} parent=35 // pred_check_branch
          %406 = sbr.rel (%p404) target = $region48
        $region47: #{tpu_custom_call.1} parent=35 // pred_region
          %s407 = sand.u32 %s26, 1
          %s408 = scalar_lea.sflag [#allocation10], %s407
          %s409 = sand.u32 %s113, 1
          %s410 = smul.addr %s409, 4
          %s411 = scalar_lea.vmem [#allocation11], %s410
          %s413 = ssub.s32 64, 64
          %414 = vsyncadd %s408, %s413
          %s415 = sadd.s32 %s35, %s33
          %s416 = smul.addr %s415, 64
          %s417 = scalar_lea.hbm %s2, %s416
          %s419 = sshll.u32 %s411, 4
          %s420 = int_to_ptr.vmem [resolvable:$true] %s419
          %422 = dma.hbm_to_vmem [thread:$0]  %s417, 64, %s420, %s408
        $region48: #{tpu_custom_call.1} parent=35 // pred_fallthru
          _
        // Predicated region
        $region49: #{tpu_custom_call.1} parent=35 // pred_check
          %p423 = pneg %p153
        $region50: #{tpu_custom_call.1} parent=35 // pred_check_branch
          %425 = sbr.rel (%p423) target = $region52
        $region51: #{tpu_custom_call.1} parent=35 // pred_region
          %p426 = scmp.lt.s32.totalorder %s33, 1
          %s427 = scalar_select %p426, %s33, 1
          %p428 = scmp.lt.s32.totalorder %s34, 0
          %s429 = scalar_select %p428, %s34, 0
          %p430 = scmp.lt.s32.totalorder %s35, 0
          %s431 = scalar_select %p430, %s35, 0
          %s432 = sadd.s32 %s431, %s429
          %s433 = sadd.s32 %s432, %s427
          %s434 = smul.addr %s433, 2
          %s435 = scalar_lea.vmem %s3, %s434
        $region52: #{tpu_custom_call.1} parent=35 // pred_fallthru
          _
      $region36: #{tpu_custom_call.1} parent=5 // pred_fallthru
        _
      %p436 = scmp.le.s32.totalorder 1, %s26
      %p437 = scmp.lt.s32.totalorder %s26, 3
      %p438 = pnand %p436, %p437
      %p439 = pneg %p438
      // Predicated region
      $region53: #{tpu_custom_call.1} parent=5 // pred_check
        _
      $region54: #{tpu_custom_call.1} parent=5 // pred_check_branch
        %441 = sbr.rel (%p438) target = $region56
      $region55: #{tpu_custom_call.1} parent=5 // pred_region
        %s442 = ssub.s32 %s26, 1
        %s443 = sand.u32 %s60, 1
        %s444 = scalar_lea.sflag [#allocation7], %s443
        %s445 = sand.u32 %s60, 1
        %s446 = smul.addr %s445, 4
        %s447 = scalar_lea.vmem [#allocation6], %s446
        // Predicated region
        $region57: #{tpu_custom_call.1} parent=55 // pred_check
          %p448 = pneg %p73
        $region58: #{tpu_custom_call.1} parent=55 // pred_check_branch
          %450 = sbr.rel (%p448) target = $region60
        $region59: #{tpu_custom_call.1} parent=55 // pred_region
          %451 = dma.done %s444, 64
        $region60: #{tpu_custom_call.1} parent=55 // pred_fallthru
          _
        %s452 = sand.u32 %s31, 1
        %s453 = scalar_lea.sflag [#allocation10], %s452
        %s454 = sand.u32 %s88, 1
        %s455 = smul.addr %s454, 4
        %s456 = scalar_lea.vmem [#allocation9], %s455
        // Predicated region
        $region61: #{tpu_custom_call.1} parent=55 // pred_check
          %p457 = pneg %p101
        $region62: #{tpu_custom_call.1} parent=55 // pred_check_branch
          %459 = sbr.rel (%p457) target = $region64
        $region63: #{tpu_custom_call.1} parent=55 // pred_region
          %460 = dma.done %s453, 64
        $region64: #{tpu_custom_call.1} parent=55 // pred_fallthru
          _
        %s461 = sand.u32 %s31, 1
        %s462 = scalar_lea.sflag [#allocation10], %s461
        %s463 = sand.u32 %s116, 1
        %s464 = smul.addr %s463, 4
        %s465 = scalar_lea.vmem [#allocation11], %s464
        // Predicated region
        $region65: #{tpu_custom_call.1} parent=55 // pred_check
          %p466 = pneg %p129
        $region66: #{tpu_custom_call.1} parent=55 // pred_check_branch
          %468 = sbr.rel (%p466) target = $region68
        $region67: #{tpu_custom_call.1} parent=55 // pred_region
          %469 = dma.done %s462, 64
        $region68: #{tpu_custom_call.1} parent=55 // pred_fallthru
          _
        // Predicated region
        $region69: #{tpu_custom_call.1} parent=55 // pred_check
          %p470 = pneg %p180
        $region70: #{tpu_custom_call.1} parent=55 // pred_check_branch
          %472 = sbr.rel (%p470) target = $region72
        $region71: #{tpu_custom_call.1} parent=55 // pred_region
          %473 = dma.done [#allocation13], 256
        $region72: #{tpu_custom_call.1} parent=55 // pred_fallthru
          _
        // Predicated region
        $region73: #{tpu_custom_call.1} parent=55 // pred_check
          %p474 = pneg %p201
        $region74: #{tpu_custom_call.1} parent=55 // pred_check_branch
          %476 = sbr.rel (%p474) target = $region76
        $region75: #{tpu_custom_call.1} parent=55 // pred_region
          %477 = dma.done [#allocation13], 256
        $region76: #{tpu_custom_call.1} parent=55 // pred_fallthru
          _
        // Predicated region
        $region77: #{tpu_custom_call.1} parent=55 // pred_check
          %p478 = pneg %p222
        $region78: #{tpu_custom_call.1} parent=55 // pred_check_branch
          %480 = sbr.rel (%p478) target = $region80
        $region79: #{tpu_custom_call.1} parent=55 // pred_region
          %481 = dma.done [#allocation16], 256
        $region80: #{tpu_custom_call.1} parent=55 // pred_fallthru
          _
        // Predicated region
        $region81: #{tpu_custom_call.1} parent=55 // pred_check
          %p482 = pneg %p243
        $region82: #{tpu_custom_call.1} parent=55 // pred_check_branch
          %484 = sbr.rel (%p482) target = $region84
        $region83: #{tpu_custom_call.1} parent=55 // pred_region
          %485 = dma.done [#allocation16], 256
        $region84: #{tpu_custom_call.1} parent=55 // pred_fallthru
          _
        %s486 = sand.u32 %s60, 1
        %s487 = scalar_lea.sflag [#allocation7], %s486
        %s488 = sand.u32 %s60, 1
        %s489 = smul.addr %s488, 4
        %s490 = scalar_lea.vmem [#allocation6], %s489
        %p491 = pneg %p73
        %p492 = pneg %p70
        %s493 = sand.u32 %s31, 1
        %s494 = scalar_lea.sflag [#allocation10], %s493
        %s495 = sand.u32 %s88, 1
        %s496 = smul.addr %s495, 4
        %s497 = scalar_lea.vmem [#allocation9], %s496
        %p498 = pneg %p101
        %p499 = pneg %p98
        %s500 = sand.u32 %s31, 1
        %s501 = scalar_lea.sflag [#allocation10], %s500
        %s502 = sand.u32 %s116, 1
        %s503 = smul.addr %s502, 4
        %s504 = scalar_lea.vmem [#allocation11], %s503
        %p505 = pneg %p129
        %p506 = pneg %p126
        %p507 = scmp.lt.s32.totalorder %s36, 1
        %s508 = scalar_select %p507, %s36, 1
        %p509 = scmp.lt.s32.totalorder %s37, 0
        %s510 = scalar_select %p509, %s37, 0
        %p511 = scmp.lt.s32.totalorder %s38, 0
        %s512 = scalar_select %p511, %s38, 0
        %s513 = sadd.s32 %s512, %s510
        %s514 = sadd.s32 %s513, %s508
        %s515 = smul.addr %s514, 2
        %s516 = scalar_lea.vmem %s3, %s515
        %p517 = pneg %p159
        %p518 = pneg %p156
        %p519 = pneg %p180
        %p520 = pneg %p177
        %p521 = pneg %p201
        %p522 = pneg %p198
        %p523 = pneg %p222
        %p524 = pneg %p219
        %p525 = pneg %p243
        %p526 = pneg %p240
        %p527 = pneg %p264
        %p528 = pneg %p261
        %p529 = pneg %p292
        %p530 = pneg %p289
        %s531 = sand.u32 %s279, 1
        %s532 = scalar_lea.sflag [#allocation8], %s531
        %s533 = sand.u32 %s279, 1
        %s534 = smul.addr %s533, 8
        %s535 = scalar_lea.vmem [#allocation18], %s534
        %p536 = scmp.lt.s32.totalorder %s36, 1
        %s537 = scalar_select %p536, %s36, 1
        %p538 = scmp.lt.s32.totalorder %s37, 0
        %s539 = scalar_select %p538, %s37, 0
        %p540 = scmp.lt.s32.totalorder %s38, 0
        %s541 = scalar_select %p540, %s38, 0
        %s542 = sadd.s32 %s541, %s539
        %s543 = sadd.s32 %s542, %s537
        %s544 = smul.addr %s543, 2
        %s545 = scalar_lea.vmem %s3, %s544
        %p547 = scmp.eq.s32.totalorder %s38, 0
        // Predicated region
        $region85: #{tpu_custom_call.1} parent=55 // pred_check
          %p548 = pneg %p547
        $region86: #{tpu_custom_call.1} parent=55 // pred_check_branch
          %550 = sbr.rel (%p548) target = $region88
        $region87: #{tpu_custom_call.1} parent=55 // pred_region
          %v551 = vld [vmem:[%s447] sm:$0xf]
          %v552 = vld [vmem:[#allocation12] sm:$0xf]
          %v553 = vld [vmem:[#allocation12 + $0x4] sm:$0xf]
          %v554 = vld [vmem:[#allocation12 + $0x8] sm:$0xf]
          %v555 = vld [vmem:[#allocation12 + $0xc] sm:$0xf]
          %v560 = vunpack.c.l.b16 %v552
          %v561 = vunpack.c.l.b16 %v553
          %v562 = vunpack.c.l.b16 %v554
          %v563 = vunpack.c.l.b16 %v555
          %v564 = vpack.c.b16 %v561, %v560
          %v565 = vpack.c.b16 %v563, %v562
          %vm568 = vcmask 261120
          %v570 = vsel %vm568, %v551, 0
          %572 = vmatprep.subr.bf16.mxu0 0
          %573 = vmatpush1.bf16.msra.mxu0 0
          %574 = vmatprep.subr.bf16.mxu0 0
          %575 = vmatpush1.bf16.msra.mxu0 0
          %576 = vmatprep.subr.bf16.mxu0 0
          %577 = vmatpush1.bf16.msra.mxu0 0
          %578 = vmatprep.subr.bf16.mxu0 0
          %579 = vmatpush1.bf16.msra.mxu0 0
          %580 = vmatprep.subr.bf16.mxu0 0
          %581 = vmatpush1.bf16.msra.mxu0 0
          %582 = vmatprep.subr.bf16.mxu0 0
          %583 = vmatpush1.bf16.msra.mxu0 0
          %584 = vmatprep.subr.bf16.mxu0 0
          %585 = vmatpush1.bf16.msra.mxu0 %v565
          %586 = vmatprep.subr.bf16.mxu0 0
          %587 = vmatpush1.bf16.msra.mxu0 %v564
          %588 = vmatprep.subr.bf16.mxu0 0
          %589 = vmatpush2.bf16.msra.mxu0 0
          %590 = vmatprep.subr.bf16.mxu0 0
          %591 = vmatpush2.bf16.msra.mxu0 0
          %592 = vmatprep.subr.bf16.mxu0 0
          %593 = vmatpush2.bf16.msra.mxu0 0
          %594 = vmatprep.subr.bf16.mxu0 0
          %595 = vmatpush2.bf16.msra.mxu0 0
          %596 = vmatprep.subr.bf16.mxu0 0
          %597 = vmatpush2.bf16.msra.mxu0 0
          %598 = vmatprep.subr.bf16.mxu0 0
          %599 = vmatpush2.bf16.msra.mxu0 0
          %600 = vmatprep.subr.bf16.mxu0 0
          %601 = vmatpush2.bf16.msra.mxu0 0
          %602 = vmatprep.subr.bf16.mxu0 0
          %603 = vmatpush2.bf16.msra.mxu0 0
          %604 = vmatprep.mubr.bf16.mxu0 0
          %605 = vmatmul.mubr.bf16.gmra.mxu0 %v570
          %v606 = vpop.f32.mrf.mxu0
          %v607 = vadd.f32 0.0, %v606
          %v608 = vpop.f32.mrf.mxu0
          %v609 = vpop.f32.mrf.mxu0
          %v610 = vpop.f32.mrf.mxu0
          %611 = vdwg.mxu0
          %v612 = vpack.c.bf16 %v607, %v607
          %vm613 = vcmask 257024
          %614 = vst.msk [vmem:[#allocation2] sm:$0xf] %vm613, %v612
          %vm615 = vcmask 7168
          %616 = vst.msk [vmem:[#allocation3] sm:$0xff] %vm615, -inf
          %617 = vst.msk [vmem:[#allocation3 + $0x8] sm:$0xff] %vm615, -inf
          %618 = vst.msk [vmem:[#allocation3 + $0x10] sm:$0xff] %vm615, -inf
          %619 = vst.msk [vmem:[#allocation3 + $0x18] sm:$0xff] %vm615, -inf
          %620 = vst.msk [vmem:[#allocation4] sm:$0xff] %vm615, 0.0
          %621 = vst.msk [vmem:[#allocation4 + $0x8] sm:$0xff] %vm615, 0.0
          %622 = vst.msk [vmem:[#allocation4 + $0x10] sm:$0xff] %vm615, 0.0
          %623 = vst.msk [vmem:[#allocation4 + $0x18] sm:$0xff] %vm615, 0.0
          %624 = vst.msk [vmem:[#allocation5] sm:$0xff] %vm568, 0.0
        $region88: #{tpu_custom_call.1} parent=55 // pred_fallthru
          _
        %v625 = vld [vmem:[%s456] sm:$0xf]
        %v626 = vld [vmem:[#allocation14] sm:$0xf]
        %v627 = vld [vmem:[#allocation14 + $0x4] sm:$0xf]
        %v628 = vld [vmem:[#allocation14 + $0x8] sm:$0xf]
        %v629 = vld [vmem:[#allocation14 + $0xc] sm:$0xf]
        %v634 = vunpack.c.l.b16 %v626
        %v635 = vunpack.c.l.b16 %v627
        %v636 = vunpack.c.l.b16 %v628
        %v637 = vunpack.c.l.b16 %v629
        %v638 = vpack.c.b16 %v635, %v634
        %v639 = vpack.c.b16 %v637, %v636
        %vm642 = vcmask 261120
        %v644 = vsel %vm642, %v625, 0
        %646 = vmatprep.subr.bf16.mxu0 0
        %647 = vmatpush1.bf16.msra.mxu0 0
        %648 = vmatprep.subr.bf16.mxu0 0
        %649 = vmatpush1.bf16.msra.mxu0 0
        %650 = vmatprep.subr.bf16.mxu0 0
        %651 = vmatpush1.bf16.msra.mxu0 0
        %652 = vmatprep.subr.bf16.mxu0 0
        %653 = vmatpush1.bf16.msra.mxu0 0
        %654 = vmatprep.subr.bf16.mxu0 0
        %655 = vmatpush1.bf16.msra.mxu0 0
        %656 = vmatprep.subr.bf16.mxu0 0
        %657 = vmatpush1.bf16.msra.mxu0 0
        %658 = vmatprep.subr.bf16.mxu0 0
        %659 = vmatpush1.bf16.msra.mxu0 %v639
        %660 = vmatprep.subr.bf16.mxu0 0
        %661 = vmatpush1.bf16.msra.mxu0 %v638
        %662 = vmatprep.subr.bf16.mxu0 0
        %663 = vmatpush2.bf16.msra.mxu0 0
        %664 = vmatprep.subr.bf16.mxu0 0
        %665 = vmatpush2.bf16.msra.mxu0 0
        %666 = vmatprep.subr.bf16.mxu0 0
        %667 = vmatpush2.bf16.msra.mxu0 0
        %668 = vmatprep.subr.bf16.mxu0 0
        %669 = vmatpush2.bf16.msra.mxu0 0
        %670 = vmatprep.subr.bf16.mxu0 0
        %671 = vmatpush2.bf16.msra.mxu0 0
        %672 = vmatprep.subr.bf16.mxu0 0
        %673 = vmatpush2.bf16.msra.mxu0 0
        %674 = vmatprep.subr.bf16.mxu0 0
        %675 = vmatpush2.bf16.msra.mxu0 0
        %676 = vmatprep.subr.bf16.mxu0 0
        %677 = vmatpush2.bf16.msra.mxu0 0
        %678 = vmatprep.mubr.bf16.mxu0 0
        %679 = vmatmul.mubr.bf16.gmra.mxu0 %v644
        %v680 = vpop.f32.mrf.mxu0
        %v681 = vadd.f32 0.0, %v680
        %v682 = vpop.f32.mrf.mxu0
        %v683 = vpop.f32.mrf.mxu0
        %v684 = vpop.f32.mrf.mxu0
        %685 = vdwg.mxu0
        %v686 = vpack.c.bf16 %v681, %v681
        %v687 = vld [vmem:[%s465] sm:$0xf]
        %v688 = vld [vmem:[#allocation15] sm:$0xf]
        %v689 = vld [vmem:[#allocation15 + $0x4] sm:$0xf]
        %v690 = vld [vmem:[#allocation15 + $0x8] sm:$0xf]
        %v691 = vld [vmem:[#allocation15 + $0xc] sm:$0xf]
        %v696 = vunpack.c.l.b16 %v688
        %v697 = vunpack.c.l.b16 %v689
        %v698 = vunpack.c.l.b16 %v690
        %v699 = vunpack.c.l.b16 %v691
        %v700 = vpack.c.b16 %v697, %v696
        %v701 = vpack.c.b16 %v699, %v698
        %v705 = vsel %vm642, %v687, 0
        %707 = vmatprep.subr.bf16.mxu0 0
        %708 = vmatpush1.bf16.msra.mxu0 0
        %709 = vmatprep.subr.bf16.mxu0 0
        %710 = vmatpush1.bf16.msra.mxu0 0
        %711 = vmatprep.subr.bf16.mxu0 0
        %712 = vmatpush1.bf16.msra.mxu0 0
        %713 = vmatprep.subr.bf16.mxu0 0
        %714 = vmatpush1.bf16.msra.mxu0 0
        %715 = vmatprep.subr.bf16.mxu0 0
        %716 = vmatpush1.bf16.msra.mxu0 0
        %717 = vmatprep.subr.bf16.mxu0 0
        %718 = vmatpush1.bf16.msra.mxu0 0
        %719 = vmatprep.subr.bf16.mxu0 0
        %720 = vmatpush1.bf16.msra.mxu0 %v701
        %721 = vmatprep.subr.bf16.mxu0 0
        %722 = vmatpush1.bf16.msra.mxu0 %v700
        %723 = vmatprep.subr.bf16.mxu0 0
        %724 = vmatpush2.bf16.msra.mxu0 0
        %725 = vmatprep.subr.bf16.mxu0 0
        %726 = vmatpush2.bf16.msra.mxu0 0
        %727 = vmatprep.subr.bf16.mxu0 0
        %728 = vmatpush2.bf16.msra.mxu0 0
        %729 = vmatprep.subr.bf16.mxu0 0
        %730 = vmatpush2.bf16.msra.mxu0 0
        %731 = vmatprep.subr.bf16.mxu0 0
        %732 = vmatpush2.bf16.msra.mxu0 0
        %733 = vmatprep.subr.bf16.mxu0 0
        %734 = vmatpush2.bf16.msra.mxu0 0
        %735 = vmatprep.subr.bf16.mxu0 0
        %736 = vmatpush2.bf16.msra.mxu0 0
        %737 = vmatprep.subr.bf16.mxu0 0
        %738 = vmatpush2.bf16.msra.mxu0 0
        %739 = vmatprep.mubr.bf16.mxu0 0
        %740 = vmatmul.mubr.bf16.gmra.mxu0 %v705
        %v741 = vpop.f32.mrf.mxu0
        %v742 = vadd.f32 0.0, %v741
        %v743 = vpop.f32.mrf.mxu0
        %v744 = vpop.f32.mrf.mxu0
        %v745 = vpop.f32.mrf.mxu0
        %746 = vdwg.mxu0
        %v747 = vpack.c.bf16 %v742, %v742
        %v748 = vld [vmem:[%s545] sm:$0x3]
        %v749 = vunpack.c.0.s8 %v748
        %vm750 = vcmp.eq.s32.totalorder %v749, 0
        %v751 = vld [vmem:[#allocation2] sm:$0xf]
        %vm752 = vcmask 64512
        %v754 = vsel %vm752, %v751, 0
        %v757 = vsel %vm752, %v686, 0
        %759 = vmatprep.subr.bf16.mxu0 0
        %760 = vmatpush1.bf16.xpose.msra.mxu0 0
        %761 = vmatprep.subr.bf16.mxu0 0
        %762 = vmatpush1.bf16.xpose.msra.mxu0 0
        %763 = vmatprep.subr.bf16.mxu0 0
        %764 = vmatpush1.bf16.xpose.msra.mxu0 0
        %765 = vmatprep.subr.bf16.mxu0 0
        %766 = vmatpush1.bf16.xpose.msra.mxu0 0
        %767 = vmatprep.subr.bf16.mxu0 0
        %768 = vmatpush1.bf16.xpose.msra.mxu0 0
        %769 = vmatprep.subr.bf16.mxu0 0
        %770 = vmatpush1.bf16.xpose.msra.mxu0 0
        %771 = vmatprep.subr.bf16.mxu0 0
        %772 = vmatpush1.bf16.xpose.msra.mxu0 0
        %773 = vmatprep.subr.bf16.mxu0 0
        %774 = vmatpush1.bf16.xpose.msra.mxu0 %v757
        %775 = vmatprep.subr.bf16.mxu0 0
        %776 = vmatpush2.bf16.xpose.msra.mxu0 0
        %777 = vmatprep.subr.bf16.mxu0 0
        %778 = vmatpush2.bf16.xpose.msra.mxu0 0
        %779 = vmatprep.subr.bf16.mxu0 0
        %780 = vmatpush2.bf16.xpose.msra.mxu0 0
        %781 = vmatprep.subr.bf16.mxu0 0
        %782 = vmatpush2.bf16.xpose.msra.mxu0 0
        %783 = vmatprep.subr.bf16.mxu0 0
        %784 = vmatpush2.bf16.xpose.msra.mxu0 0
        %785 = vmatprep.subr.bf16.mxu0 0
        %786 = vmatpush2.bf16.xpose.msra.mxu0 0
        %787 = vmatprep.subr.bf16.mxu0 0
        %788 = vmatpush2.bf16.xpose.msra.mxu0 0
        %789 = vmatprep.subr.bf16.mxu0 0
        %790 = vmatpush2.bf16.xpose.msra.mxu0 0
        %791 = vmatprep.mubr.bf16.mxu0 0
        %792 = vmatmul.mubr.bf16.gmra.mxu0 %v754
        %v793 = vpop.f32.mrf.mxu0
        %v794 = vadd.f32 0.0, %v793
        %v795 = vpop.f32.mrf.mxu0
        %v796 = vpop.f32.mrf.mxu0
        %v797 = vpop.f32.mrf.mxu0
        %798 = vdwg.mxu0
        %v799 = vsel %vm750, -1e+20, %v794
        %v800 = vld [vmem:[#allocation3] sm:$0xff]
        %v801 = vsel %vm752, %v799, -inf
        %802 = vmax.xlane.f32.xlu0 %v801
        %v803 = vpop.xlane.xlu0 %802
        %v804 = vmax.f32 %v800, %v803
        %v805 = vsub.f32 %v800, %v804
        %v806 = vmul.f32 %v805, 1.442695
        %v807 = vpow.pop %v806
        %809 = vset.pattern.permute.xlu0 0
        %810 = vperm.xlu0 %809, %v804
        %v811 = vpop.permute.xlu0 %810
        %v813 = vsub.f32 %v799, %v811
        %v814 = vmul.f32 %v813, 1.442695
        %v815 = vpow.pop %v814
        %v816 = vld [vmem:[#allocation4] sm:$0xff]
        %v817 = vmul.f32 %v807, %v816
        %v818 = vsel %vm752, %v815, 0.0
        %819 = vadd.xlane.f32.xlu0 %v818
        %v820 = vpop.xlane.xlu0 %819
        %v821 = vadd.f32 %v817, %v820
        %vm822 = vcmask 7168
        %823 = vst.msk [vmem:[#allocation4] sm:$0xff] %vm822, %v821
        %824 = vst.msk [vmem:[#allocation3] sm:$0xff] %vm822, %v804
        %v825 = vld [vmem:[#allocation5] sm:$0xff]
        %827 = vset.pattern.permute.xlu0 0
        %828 = vperm.xlu0 %827, %v807
        %v829 = vpop.permute.xlu0 %828
        %v831 = vmul.f32 %v829, %v825
        %v832 = vpack.c.bf16 %v815, %v815
        %v834 = vsel %vm752, %v832, 0
        %vm836 = vcmask 1043456
        %v838 = vsel %vm836, %v747, 0
        %840 = vmatprep.subr.bf16.mxu0 0
        %841 = vmatpush1.bf16.msra.mxu0 0
        %842 = vmatprep.subr.bf16.mxu0 0
        %843 = vmatpush1.bf16.msra.mxu0 0
        %844 = vmatprep.subr.bf16.mxu0 0
        %845 = vmatpush1.bf16.msra.mxu0 0
        %846 = vmatprep.subr.bf16.mxu0 0
        %847 = vmatpush1.bf16.msra.mxu0 0
        %848 = vmatprep.subr.bf16.mxu0 0
        %849 = vmatpush1.bf16.msra.mxu0 0
        %850 = vmatprep.subr.bf16.mxu0 0
        %851 = vmatpush1.bf16.msra.mxu0 0
        %852 = vmatprep.subr.bf16.mxu0 0
        %853 = vmatpush1.bf16.msra.mxu0 0
        %854 = vmatprep.subr.bf16.mxu0 0
        %855 = vmatpush1.bf16.msra.mxu0 %v838
        %856 = vmatprep.subr.bf16.mxu0 0
        %857 = vmatpush2.bf16.msra.mxu0 0
        %858 = vmatprep.subr.bf16.mxu0 0
        %859 = vmatpush2.bf16.msra.mxu0 0
        %860 = vmatprep.subr.bf16.mxu0 0
        %861 = vmatpush2.bf16.msra.mxu0 0
        %862 = vmatprep.subr.bf16.mxu0 0
        %863 = vmatpush2.bf16.msra.mxu0 0
        %864 = vmatprep.subr.bf16.mxu0 0
        %865 = vmatpush2.bf16.msra.mxu0 0
        %866 = vmatprep.subr.bf16.mxu0 0
        %867 = vmatpush2.bf16.msra.mxu0 0
        %868 = vmatprep.subr.bf16.mxu0 0
        %869 = vmatpush2.bf16.msra.mxu0 0
        %870 = vmatprep.subr.bf16.mxu0 0
        %871 = vmatpush2.bf16.msra.mxu0 0
        %872 = vmatprep.mubr.bf16.mxu0 0
        %873 = vmatmul.mubr.bf16.gmra.mxu0 %v834
        %v874 = vpop.f32.mrf.mxu0
        %v875 = vadd.f32 0.0, %v874
        %v876 = vpop.f32.mrf.mxu0
        %v877 = vpop.f32.mrf.mxu0
        %v878 = vpop.f32.mrf.mxu0
        %879 = vdwg.mxu0
        %v880 = vadd.f32 %v831, %v875
        %881 = vst.msk [vmem:[#allocation5] sm:$0xff] %vm752, %v880
        %v882 = vld [vmem:[#allocation2] sm:$0xf]
        %v884 = vunpack.c.l.b16 %v882
        %v885 = vpack.c.b16 %v884, %v884
        %886 = vrot.lane.b32.xlu0 %v885, 120
        %v887 = vpop.permute.xlu0 %886
        %889 = vrot.lane.b32.xlu0 %v686, 120
        %v890 = vpop.permute.xlu0 %889
        %v892 = vsel %vm752, %v887, 0
        %v895 = vsel %vm752, %v890, 0
        %897 = vmatprep.subr.bf16.mxu0 0
        %898 = vmatpush1.bf16.xpose.msra.mxu0 0
        %899 = vmatprep.subr.bf16.mxu0 0
        %900 = vmatpush1.bf16.xpose.msra.mxu0 0
        %901 = vmatprep.subr.bf16.mxu0 0
        %902 = vmatpush1.bf16.xpose.msra.mxu0 0
        %903 = vmatprep.subr.bf16.mxu0 0
        %904 = vmatpush1.bf16.xpose.msra.mxu0 0
        %905 = vmatprep.subr.bf16.mxu0 0
        %906 = vmatpush1.bf16.xpose.msra.mxu0 0
        %907 = vmatprep.subr.bf16.mxu0 0
        %908 = vmatpush1.bf16.xpose.msra.mxu0 0
        %909 = vmatprep.subr.bf16.mxu0 0
        %910 = vmatpush1.bf16.xpose.msra.mxu0 0
        %911 = vmatprep.subr.bf16.mxu0 0
        %912 = vmatpush1.bf16.xpose.msra.mxu0 %v895
        %913 = vmatprep.subr.bf16.mxu0 0
        %914 = vmatpush2.bf16.xpose.msra.mxu0 0
        %915 = vmatprep.subr.bf16.mxu0 0
        %916 = vmatpush2.bf16.xpose.msra.mxu0 0
        %917 = vmatprep.subr.bf16.mxu0 0
        %918 = vmatpush2.bf16.xpose.msra.mxu0 0
        %919 = vmatprep.subr.bf16.mxu0 0
        %920 = vmatpush2.bf16.xpose.msra.mxu0 0
        %921 = vmatprep.subr.bf16.mxu0 0
        %922 = vmatpush2.bf16.xpose.msra.mxu0 0
        %923 = vmatprep.subr.bf16.mxu0 0
        %924 = vmatpush2.bf16.xpose.msra.mxu0 0
        %925 = vmatprep.subr.bf16.mxu0 0
        %926 = vmatpush2.bf16.xpose.msra.mxu0 0
        %927 = vmatprep.subr.bf16.mxu0 0
        %928 = vmatpush2.bf16.xpose.msra.mxu0 0
        %929 = vmatprep.mubr.bf16.mxu0 0
        %930 = vmatmul.mubr.bf16.gmra.mxu0 %v892
        %v931 = vpop.f32.mrf.mxu0
        %v932 = vadd.f32 0.0, %v931
        %v933 = vpop.f32.mrf.mxu0
        %v934 = vpop.f32.mrf.mxu0
        %v935 = vpop.f32.mrf.mxu0
        %936 = vdwg.mxu0
        %v937 = vsel %vm750, -1e+20, %v932
        %s938 = scalar_lea.vmem [#allocation3], 8
        %v939 = vld [vmem:[%s938] sm:$0xff]
        %v940 = vsel %vm752, %v937, -inf
        %941 = vmax.xlane.f32.xlu0 %v940
        %v942 = vpop.xlane.xlu0 %941
        %v943 = vmax.f32 %v939, %v942
        %v944 = vsub.f32 %v939, %v943
        %v945 = vmul.f32 %v944, 1.442695
        %v946 = vpow.pop %v945
        %948 = vset.pattern.permute.xlu0 0
        %949 = vperm.xlu0 %948, %v943
        %v950 = vpop.permute.xlu0 %949
        %v952 = vsub.f32 %v937, %v950
        %v953 = vmul.f32 %v952, 1.442695
        %v954 = vpow.pop %v953
        %s955 = scalar_lea.vmem [#allocation4], 8
        %v956 = vld [vmem:[%s955] sm:$0xff]
        %v957 = vmul.f32 %v946, %v956
        %v958 = vsel %vm752, %v954, 0.0
        %959 = vadd.xlane.f32.xlu0 %v958
        %v960 = vpop.xlane.xlu0 %959
        %v961 = vadd.f32 %v957, %v960
        %962 = vst.msk [vmem:[%s955] sm:$0xff] %vm822, %v961
        %963 = vst.msk [vmem:[%s938] sm:$0xff] %vm822, %v943
        %v964 = vld [vmem:[#allocation5] sm:$0xff]
        %966 = vset.pattern.permute.xlu0 0
        %967 = vperm.xlu0 %966, %v946
        %v968 = vpop.permute.xlu0 %967
        %v970 = vmul.f32 %v968, %v964
        %v971 = vpack.c.bf16 %v954, %v954
        %973 = vrot.lane.b32.xlu0 %v747, 120
        %v974 = vpop.permute.xlu0 %973
        %v976 = vsel %vm752, %v971, 0
        %v979 = vsel %vm836, %v974, 0
        %981 = vmatprep.subr.bf16.mxu0 0
        %982 = vmatpush1.bf16.msra.mxu0 0
        %983 = vmatprep.subr.bf16.mxu0 0
        %984 = vmatpush1.bf16.msra.mxu0 0
        %985 = vmatprep.subr.bf16.mxu0 0
        %986 = vmatpush1.bf16.msra.mxu0 0
        %987 = vmatprep.subr.bf16.mxu0 0
        %988 = vmatpush1.bf16.msra.mxu0 0
        %989 = vmatprep.subr.bf16.mxu0 0
        %990 = vmatpush1.bf16.msra.mxu0 0
        %991 = vmatprep.subr.bf16.mxu0 0
        %992 = vmatpush1.bf16.msra.mxu0 0
        %993 = vmatprep.subr.bf16.mxu0 0
        %994 = vmatpush1.bf16.msra.mxu0 0
        %995 = vmatprep.subr.bf16.mxu0 0
        %996 = vmatpush1.bf16.msra.mxu0 %v979
        %997 = vmatprep.subr.bf16.mxu0 0
        %998 = vmatpush2.bf16.msra.mxu0 0
        %999 = vmatprep.subr.bf16.mxu0 0
        %1000 = vmatpush2.bf16.msra.mxu0 0
        %1001 = vmatprep.subr.bf16.mxu0 0
        %1002 = vmatpush2.bf16.msra.mxu0 0
        %1003 = vmatprep.subr.bf16.mxu0 0
        %1004 = vmatpush2.bf16.msra.mxu0 0
        %1005 = vmatprep.subr.bf16.mxu0 0
        %1006 = vmatpush2.bf16.msra.mxu0 0
        %1007 = vmatprep.subr.bf16.mxu0 0
        %1008 = vmatpush2.bf16.msra.mxu0 0
        %1009 = vmatprep.subr.bf16.mxu0 0
        %1010 = vmatpush2.bf16.msra.mxu0 0
        %1011 = vmatprep.subr.bf16.mxu0 0
        %1012 = vmatpush2.bf16.msra.mxu0 0
        %1013 = vmatprep.mubr.bf16.mxu0 0
        %1014 = vmatmul.mubr.bf16.gmra.mxu0 %v976
        %v1015 = vpop.f32.mrf.mxu0
        %v1016 = vadd.f32 0.0, %v1015
        %v1017 = vpop.f32.mrf.mxu0
        %v1018 = vpop.f32.mrf.mxu0
        %v1019 = vpop.f32.mrf.mxu0
        %1020 = vdwg.mxu0
        %1022 = vrot.lane.b32.xlu0 %v1016, 8
        %v1023 = vpop.permute.xlu0 %1022
        %v1025 = vadd.f32 %v970, %v1023
        %vm1026 = vcmask 130112
        %1027 = vst.msk [vmem:[#allocation5] sm:$0xff] %vm1026, %v1025
        %v1028 = vld [vmem:[#allocation2] sm:$0xf]
        %v1030 = vunpack.c.l.b16 %v1028
        %v1031 = vpack.c.b16 %v1030, %v1030
        %1032 = vrot.lane.b32.xlu0 %v1031, 112
        %v1033 = vpop.permute.xlu0 %1032
        %1034 = vrot.lane.b32.xlu0 %v686, 112
        %v1035 = vpop.permute.xlu0 %1034
        %v1037 = vsel %vm752, %v1033, 0
        %v1040 = vsel %vm752, %v1035, 0
        %1042 = vmatprep.subr.bf16.mxu0 0
        %1043 = vmatpush1.bf16.xpose.msra.mxu0 0
        %1044 = vmatprep.subr.bf16.mxu0 0
        %1045 = vmatpush1.bf16.xpose.msra.mxu0 0
        %1046 = vmatprep.subr.bf16.mxu0 0
        %1047 = vmatpush1.bf16.xpose.msra.mxu0 0
        %1048 = vmatprep.subr.bf16.mxu0 0
        %1049 = vmatpush1.bf16.xpose.msra.mxu0 0
        %1050 = vmatprep.subr.bf16.mxu0 0
        %1051 = vmatpush1.bf16.xpose.msra.mxu0 0
        %1052 = vmatprep.subr.bf16.mxu0 0
        %1053 = vmatpush1.bf16.xpose.msra.mxu0 0
        %1054 = vmatprep.subr.bf16.mxu0 0
        %1055 = vmatpush1.bf16.xpose.msra.mxu0 0
        %1056 = vmatprep.subr.bf16.mxu0 0
        %1057 = vmatpush1.bf16.xpose.msra.mxu0 %v1040
        %1058 = vmatprep.subr.bf16.mxu0 0
        %1059 = vmatpush2.bf16.xpose.msra.mxu0 0
        %1060 = vmatprep.subr.bf16.mxu0 0
        %1061 = vmatpush2.bf16.xpose.msra.mxu0 0
        %1062 = vmatprep.subr.bf16.mxu0 0
        %1063 = vmatpush2.bf16.xpose.msra.mxu0 0
        %1064 = vmatprep.subr.bf16.mxu0 0
        %1065 = vmatpush2.bf16.xpose.msra.mxu0 0
        %1066 = vmatprep.subr.bf16.mxu0 0
        %1067 = vmatpush2.bf16.xpose.msra.mxu0 0
        %1068 = vmatprep.subr.bf16.mxu0 0
        %1069 = vmatpush2.bf16.xpose.msra.mxu0 0
        %1070 = vmatprep.subr.bf16.mxu0 0
        %1071 = vmatpush2.bf16.xpose.msra.mxu0 0
        %1072 = vmatprep.subr.bf16.mxu0 0
        %1073 = vmatpush2.bf16.xpose.msra.mxu0 0
        %1074 = vmatprep.mubr.bf16.mxu0 0
        %1075 = vmatmul.mubr.bf16.gmra.mxu0 %v1037
        %v1076 = vpop.f32.mrf.mxu0
        %v1077 = vadd.f32 0.0, %v1076
        %v1078 = vpop.f32.mrf.mxu0
        %v1079 = vpop.f32.mrf.mxu0
        %v1080 = vpop.f32.mrf.mxu0
        %1081 = vdwg.mxu0
        %v1082 = vsel %vm750, -1e+20, %v1077
        %s1083 = scalar_lea.vmem [#allocation3], 16
        %v1084 = vld [vmem:[%s1083] sm:$0xff]
        %v1085 = vsel %vm752, %v1082, -inf
        %1086 = vmax.xlane.f32.xlu0 %v1085
        %v1087 = vpop.xlane.xlu0 %1086
        %v1088 = vmax.f32 %v1084, %v1087
        %v1089 = vsub.f32 %v1084, %v1088
        %v1090 = vmul.f32 %v1089, 1.442695
        %v1091 = vpow.pop %v1090
        %1093 = vset.pattern.permute.xlu0 0
        %1094 = vperm.xlu0 %1093, %v1088
        %v1095 = vpop.permute.xlu0 %1094
        %v1097 = vsub.f32 %v1082, %v1095
        %v1098 = vmul.f32 %v1097, 1.442695
        %v1099 = vpow.pop %v1098
        %s1100 = scalar_lea.vmem [#allocation4], 16
        %v1101 = vld [vmem:[%s1100] sm:$0xff]
        %v1102 = vmul.f32 %v1091, %v1101
        %v1103 = vsel %vm752, %v1099, 0.0
        %1104 = vadd.xlane.f32.xlu0 %v1103
        %v1105 = vpop.xlane.xlu0 %1104
        %v1106 = vadd.f32 %v1102, %v1105
        %1107 = vst.msk [vmem:[%s1100] sm:$0xff] %vm822, %v1106
        %1108 = vst.msk [vmem:[%s1083] sm:$0xff] %vm822, %v1088
        %v1109 = vld [vmem:[#allocation5] sm:$0xff]
        %1111 = vset.pattern.permute.xlu0 0
        %1112 = vperm.xlu0 %1111, %v1091
        %v1113 = vpop.permute.xlu0 %1112
        %v1115 = vmul.f32 %v1113, %v1109
        %v1116 = vpack.c.bf16 %v1099, %v1099
        %1117 = vrot.lane.b32.xlu0 %v747, 112
        %v1118 = vpop.permute.xlu0 %1117
        %v1120 = vsel %vm752, %v1116, 0
        %v1123 = vsel %vm836, %v1118, 0
        %1125 = vmatprep.subr.bf16.mxu0 0
        %1126 = vmatpush1.bf16.msra.mxu0 0
        %1127 = vmatprep.subr.bf16.mxu0 0
        %1128 = vmatpush1.bf16.msra.mxu0 0
        %1129 = vmatprep.subr.bf16.mxu0 0
        %1130 = vmatpush1.bf16.msra.mxu0 0
        %1131 = vmatprep.subr.bf16.mxu0 0
        %1132 = vmatpush1.bf16.msra.mxu0 0
        %1133 = vmatprep.subr.bf16.mxu0 0
        %1134 = vmatpush1.bf16.msra.mxu0 0
        %1135 = vmatprep.subr.bf16.mxu0 0
        %1136 = vmatpush1.bf16.msra.mxu0 0
        %1137 = vmatprep.subr.bf16.mxu0 0
        %1138 = vmatpush1.bf16.msra.mxu0 0
        %1139 = vmatprep.subr.bf16.mxu0 0
        %1140 = vmatpush1.bf16.msra.mxu0 %v1123
        %1141 = vmatprep.subr.bf16.mxu0 0
        %1142 = vmatpush2.bf16.msra.mxu0 0
        %1143 = vmatprep.subr.bf16.mxu0 0
        %1144 = vmatpush2.bf16.msra.mxu0 0
        %1145 = vmatprep.subr.bf16.mxu0 0
        %1146 = vmatpush2.bf16.msra.mxu0 0
        %1147 = vmatprep.subr.bf16.mxu0 0
        %1148 = vmatpush2.bf16.msra.mxu0 0
        %1149 = vmatprep.subr.bf16.mxu0 0
        %1150 = vmatpush2.bf16.msra.mxu0 0
        %1151 = vmatprep.subr.bf16.mxu0 0
        %1152 = vmatpush2.bf16.msra.mxu0 0
        %1153 = vmatprep.subr.bf16.mxu0 0
        %1154 = vmatpush2.bf16.msra.mxu0 0
        %1155 = vmatprep.subr.bf16.mxu0 0
        %1156 = vmatpush2.bf16.msra.mxu0 0
        %1157 = vmatprep.mubr.bf16.mxu0 0
        %1158 = vmatmul.mubr.bf16.gmra.mxu0 %v1120
        %v1159 = vpop.f32.mrf.mxu0
        %v1160 = vadd.f32 0.0, %v1159
        %v1161 = vpop.f32.mrf.mxu0
        %v1162 = vpop.f32.mrf.mxu0
        %v1163 = vpop.f32.mrf.mxu0
        %1164 = vdwg.mxu0
        %1166 = vrot.lane.b32.xlu0 %v1160, 16
        %v1167 = vpop.permute.xlu0 %1166
        %v1169 = vadd.f32 %v1115, %v1167
        %vm1170 = vcmask 195712
        %1171 = vst.msk [vmem:[#allocation5] sm:$0xff] %vm1170, %v1169
        %v1172 = vld [vmem:[#allocation2] sm:$0xf]
        %v1174 = vunpack.c.l.b16 %v1172
        %v1175 = vpack.c.b16 %v1174, %v1174
        %1176 = vrot.lane.b32.xlu0 %v1175, 104
        %v1177 = vpop.permute.xlu0 %1176
        %1178 = vrot.lane.b32.xlu0 %v686, 104
        %v1179 = vpop.permute.xlu0 %1178
        %v1181 = vsel %vm752, %v1177, 0
        %v1184 = vsel %vm752, %v1179, 0
        %1186 = vmatprep.subr.bf16.mxu0 0
        %1187 = vmatpush1.bf16.xpose.msra.mxu0 0
        %1188 = vmatprep.subr.bf16.mxu0 0
        %1189 = vmatpush1.bf16.xpose.msra.mxu0 0
        %1190 = vmatprep.subr.bf16.mxu0 0
        %1191 = vmatpush1.bf16.xpose.msra.mxu0 0
        %1192 = vmatprep.subr.bf16.mxu0 0
        %1193 = vmatpush1.bf16.xpose.msra.mxu0 0
        %1194 = vmatprep.subr.bf16.mxu0 0
        %1195 = vmatpush1.bf16.xpose.msra.mxu0 0
        %1196 = vmatprep.subr.bf16.mxu0 0
        %1197 = vmatpush1.bf16.xpose.msra.mxu0 0
        %1198 = vmatprep.subr.bf16.mxu0 0
        %1199 = vmatpush1.bf16.xpose.msra.mxu0 0
        %1200 = vmatprep.subr.bf16.mxu0 0
        %1201 = vmatpush1.bf16.xpose.msra.mxu0 %v1184
        %1202 = vmatprep.subr.bf16.mxu0 0
        %1203 = vmatpush2.bf16.xpose.msra.mxu0 0
        %1204 = vmatprep.subr.bf16.mxu0 0
        %1205 = vmatpush2.bf16.xpose.msra.mxu0 0
        %1206 = vmatprep.subr.bf16.mxu0 0
        %1207 = vmatpush2.bf16.xpose.msra.mxu0 0
        %1208 = vmatprep.subr.bf16.mxu0 0
        %1209 = vmatpush2.bf16.xpose.msra.mxu0 0
        %1210 = vmatprep.subr.bf16.mxu0 0
        %1211 = vmatpush2.bf16.xpose.msra.mxu0 0
        %1212 = vmatprep.subr.bf16.mxu0 0
        %1213 = vmatpush2.bf16.xpose.msra.mxu0 0
        %1214 = vmatprep.subr.bf16.mxu0 0
        %1215 = vmatpush2.bf16.xpose.msra.mxu0 0
        %1216 = vmatprep.subr.bf16.mxu0 0
        %1217 = vmatpush2.bf16.xpose.msra.mxu0 0
        %1218 = vmatprep.mubr.bf16.mxu0 0
        %1219 = vmatmul.mubr.bf16.gmra.mxu0 %v1181
        %v1220 = vpop.f32.mrf.mxu0
        %v1221 = vadd.f32 0.0, %v1220
        %v1222 = vpop.f32.mrf.mxu0
        %v1223 = vpop.f32.mrf.mxu0
        %v1224 = vpop.f32.mrf.mxu0
        %1225 = vdwg.mxu0
        %v1226 = vsel %vm750, -1e+20, %v1221
        %s1227 = scalar_lea.vmem [#allocation3], 24
        %v1228 = vld [vmem:[%s1227] sm:$0xff]
        %v1229 = vsel %vm752, %v1226, -inf
        %1230 = vmax.xlane.f32.xlu0 %v1229
        %v1231 = vpop.xlane.xlu0 %1230
        %v1232 = vmax.f32 %v1228, %v1231
        %v1233 = vsub.f32 %v1228, %v1232
        %v1234 = vmul.f32 %v1233, 1.442695
        %v1235 = vpow.pop %v1234
        %1237 = vset.pattern.permute.xlu0 0
        %1238 = vperm.xlu0 %1237, %v1232
        %v1239 = vpop.permute.xlu0 %1238
        %v1241 = vsub.f32 %v1226, %v1239
        %v1242 = vmul.f32 %v1241, 1.442695
        %v1243 = vpow.pop %v1242
        %s1244 = scalar_lea.vmem [#allocation4], 24
        %v1245 = vld [vmem:[%s1244] sm:$0xff]
        %v1246 = vmul.f32 %v1235, %v1245
        %v1247 = vsel %vm752, %v1243, 0.0
        %1248 = vadd.xlane.f32.xlu0 %v1247
        %v1249 = vpop.xlane.xlu0 %1248
        %v1250 = vadd.f32 %v1246, %v1249
        %1251 = vst.msk [vmem:[%s1244] sm:$0xff] %vm822, %v1250
        %1252 = vst.msk [vmem:[%s1227] sm:$0xff] %vm822, %v1232
        %v1253 = vld [vmem:[#allocation5] sm:$0xff]
        %1255 = vset.pattern.permute.xlu0 0
        %1256 = vperm.xlu0 %1255, %v1235
        %v1257 = vpop.permute.xlu0 %1256
        %v1259 = vmul.f32 %v1257, %v1253
        %v1260 = vpack.c.bf16 %v1243, %v1243
        %1261 = vrot.lane.b32.xlu0 %v747, 104
        %v1262 = vpop.permute.xlu0 %1261
        %v1264 = vsel %vm752, %v1260, 0
        %v1267 = vsel %vm836, %v1262, 0
        %1269 = vmatprep.subr.bf16.mxu0 0
        %1270 = vmatpush1.bf16.msra.mxu0 0
        %1271 = vmatprep.subr.bf16.mxu0 0
        %1272 = vmatpush1.bf16.msra.mxu0 0
        %1273 = vmatprep.subr.bf16.mxu0 0
        %1274 = vmatpush1.bf16.msra.mxu0 0
        %1275 = vmatprep.subr.bf16.mxu0 0
        %1276 = vmatpush1.bf16.msra.mxu0 0
        %1277 = vmatprep.subr.bf16.mxu0 0
        %1278 = vmatpush1.bf16.msra.mxu0 0
        %1279 = vmatprep.subr.bf16.mxu0 0
        %1280 = vmatpush1.bf16.msra.mxu0 0
        %1281 = vmatprep.subr.bf16.mxu0 0
        %1282 = vmatpush1.bf16.msra.mxu0 0
        %1283 = vmatprep.subr.bf16.mxu0 0
        %1284 = vmatpush1.bf16.msra.mxu0 %v1267
        %1285 = vmatprep.subr.bf16.mxu0 0
        %1286 = vmatpush2.bf16.msra.mxu0 0
        %1287 = vmatprep.subr.bf16.mxu0 0
        %1288 = vmatpush2.bf16.msra.mxu0 0
        %1289 = vmatprep.subr.bf16.mxu0 0
        %1290 = vmatpush2.bf16.msra.mxu0 0
        %1291 = vmatprep.subr.bf16.mxu0 0
        %1292 = vmatpush2.bf16.msra.mxu0 0
        %1293 = vmatprep.subr.bf16.mxu0 0
        %1294 = vmatpush2.bf16.msra.mxu0 0
        %1295 = vmatprep.subr.bf16.mxu0 0
        %1296 = vmatpush2.bf16.msra.mxu0 0
        %1297 = vmatprep.subr.bf16.mxu0 0
        %1298 = vmatpush2.bf16.msra.mxu0 0
        %1299 = vmatprep.subr.bf16.mxu0 0
        %1300 = vmatpush2.bf16.msra.mxu0 0
        %1301 = vmatprep.mubr.bf16.mxu0 0
        %1302 = vmatmul.mubr.bf16.gmra.mxu0 %v1264
        %v1303 = vpop.f32.mrf.mxu0
        %v1304 = vadd.f32 0.0, %v1303
        %v1305 = vpop.f32.mrf.mxu0
        %v1306 = vpop.f32.mrf.mxu0
        %v1307 = vpop.f32.mrf.mxu0
        %1308 = vdwg.mxu0
        %1310 = vrot.lane.b32.xlu0 %v1304, 24
        %v1311 = vpop.permute.xlu0 %1310
        %v1313 = vadd.f32 %v1259, %v1311
        %vm1314 = vcmask 261312
        %1315 = vst.msk [vmem:[#allocation5] sm:$0xff] %vm1314, %v1313
        // Predicated region
        $region89: #{tpu_custom_call.1} parent=55 // pred_check
          %p1316 = pneg %p547
        $region90: #{tpu_custom_call.1} parent=55 // pred_check_branch
          %1318 = sbr.rel (%p1316) target = $region92
        $region91: #{tpu_custom_call.1} parent=55 // pred_region
          %v1319 = vld [vmem:[#allocation4] sm:$0xff]
          %v1320 = vrcp.pop %v1319
          %v1321 = vld [vmem:[#allocation5] sm:$0xff]
          %1323 = vset.pattern.permute.xlu0 0
          %1324 = vperm.xlu0 %1323, %v1320
          %v1325 = vpop.permute.xlu0 %1324
          %v1327 = vmul.f32 %v1321, %v1325
          %v1328 = vld [vmem:[%s955] sm:$0xff]
          %v1329 = vrcp.pop %v1328
          %1331 = vset.pattern.permute.xlu0 0
          %1332 = vperm.xlu0 %1331, %v1329
          %v1333 = vpop.permute.xlu0 %1332
          %v1335 = vmul.f32 %v1321, %v1333
          %v1336 = vld [vmem:[%s1100] sm:$0xff]
          %v1337 = vrcp.pop %v1336
          %1339 = vset.pattern.permute.xlu0 0
          %1340 = vperm.xlu0 %1339, %v1337
          %v1341 = vpop.permute.xlu0 %1340
          %v1343 = vmul.f32 %v1321, %v1341
          %v1344 = vld [vmem:[%s1244] sm:$0xff]
          %v1345 = vrcp.pop %v1344
          %1347 = vset.pattern.permute.xlu0 0
          %1348 = vperm.xlu0 %1347, %v1345
          %v1349 = vpop.permute.xlu0 %1348
          %v1351 = vmul.f32 %v1321, %v1349
          %v1352 = vsel %vm752, %v1327, %v1335
          %vm1353 = vcmask 130048
          %v1354 = vsel %vm1353, %v1352, %v1343
          %vm1355 = vcmask 195584
          %v1356 = vsel %vm1355, %v1354, %v1351
          %v1357 = vpack.c.bf16 %v1356, %v1356
          %v1358 = vld [vmem:[#allocation17] sm:$0xf]
          %v1359 = vld [vmem:[#allocation17 + $0x4] sm:$0xf]
          %v1360 = vld [vmem:[#allocation17 + $0x8] sm:$0xf]
          %v1361 = vld [vmem:[#allocation17 + $0xc] sm:$0xf]
          %v1362 = vld [vmem:[%s8] sm:$0x1]
          %v1364 = vlaneseq
          %v1365 = vshrl.u32 %v1364, 7
          %v1366 = vsub.s32 0, %v1365
          %v1367 = vrot.slane %v1362, %v1366
          %v1373 = vunpack.c.l.b16 %v1358
          %v1374 = vunpack.c.l.b16 %v1359
          %v1375 = vunpack.c.l.b16 %v1360
          %v1376 = vunpack.c.l.b16 %v1361
          %v1377 = vpack.c.b16 %v1374, %v1373
          %v1378 = vpack.c.b16 %v1376, %v1375
          %v1382 = vsel %vm642, %v1357, 0
          %1384 = vmatprep.subr.bf16.mxu0 0
          %1385 = vmatpush1.bf16.msra.mxu0 0
          %1386 = vmatprep.subr.bf16.mxu0 0
          %1387 = vmatpush1.bf16.msra.mxu0 0
          %1388 = vmatprep.subr.bf16.mxu0 0
          %1389 = vmatpush1.bf16.msra.mxu0 0
          %1390 = vmatprep.subr.bf16.mxu0 0
          %1391 = vmatpush1.bf16.msra.mxu0 0
          %1392 = vmatprep.subr.bf16.mxu0 0
          %1393 = vmatpush1.bf16.msra.mxu0 0
          %1394 = vmatprep.subr.bf16.mxu0 0
          %1395 = vmatpush1.bf16.msra.mxu0 0
          %1396 = vmatprep.subr.bf16.mxu0 0
          %1397 = vmatpush1.bf16.msra.mxu0 %v1378
          %1398 = vmatprep.subr.bf16.mxu0 0
          %1399 = vmatpush1.bf16.msra.mxu0 %v1377
          %1400 = vmatprep.subr.bf16.mxu0 0
          %1401 = vmatpush2.bf16.msra.mxu0 0
          %1402 = vmatprep.subr.bf16.mxu0 0
          %1403 = vmatpush2.bf16.msra.mxu0 0
          %1404 = vmatprep.subr.bf16.mxu0 0
          %1405 = vmatpush2.bf16.msra.mxu0 0
          %1406 = vmatprep.subr.bf16.mxu0 0
          %1407 = vmatpush2.bf16.msra.mxu0 0
          %1408 = vmatprep.subr.bf16.mxu0 0
          %1409 = vmatpush2.bf16.msra.mxu0 0
          %1410 = vmatprep.subr.bf16.mxu0 0
          %1411 = vmatpush2.bf16.msra.mxu0 0
          %1412 = vmatprep.subr.bf16.mxu0 0
          %1413 = vmatpush2.bf16.msra.mxu0 0
          %1414 = vmatprep.subr.bf16.mxu0 0
          %1415 = vmatpush2.bf16.msra.mxu0 0
          %1416 = vmatprep.mubr.bf16.mxu0 0
          %1417 = vmatmul.mubr.bf16.gmra.mxu0 %v1382
          %v1418 = vpop.f32.mrf.mxu0
          %v1419 = vadd.f32 %v1367, %v1418
          %v1420 = vpop.f32.mrf.mxu0
          %v1421 = vpop.f32.mrf.mxu0
          %v1422 = vpop.f32.mrf.mxu0
          %1423 = vdwg.mxu0
          %1424 = vst.msk [vmem:[%s535] sm:$0xff] %vm642, %v1419
        $region92: #{tpu_custom_call.1} parent=55 // pred_fallthru
          _
        %s1425 = sand.u32 %s279, 1
        %s1426 = scalar_lea.sflag [#allocation8], %s1425
        %s1427 = sand.u32 %s279, 1
        %s1428 = smul.addr %s1427, 8
        %s1429 = scalar_lea.vmem [#allocation18], %s1428
        // Predicated region
        $region93: #{tpu_custom_call.1} parent=55 // pred_check
          %p1430 = pneg %p289
        $region94: #{tpu_custom_call.1} parent=55 // pred_check_branch
          %1432 = sbr.rel (%p1430) target = $region96
        $region95: #{tpu_custom_call.1} parent=55 // pred_region
          %s1434 = ssub.s32 128, 128
          %1435 = vsyncadd %s1426, %s1434
          %s1436 = sadd.s32 %s37, %s36
          %s1437 = smul.addr %s1436, 128
          %s1438 = scalar_lea.hbm %s9, %s1437
          %s1440 = sshll.u32 %s1429, 4
          %s1441 = int_to_ptr.vmem [resolvable:$true] %s1440
          %1443 = dma.vmem_to_hbm [thread:$0]  %s1441, 128, %s1438, %s1426
        $region96: #{tpu_custom_call.1} parent=55 // pred_fallthru
          _
      $region56: #{tpu_custom_call.1} parent=5 // pred_fallthru
        _
      %p1444 = scmp.le.s32.totalorder 2, %s26
      // Predicated region
      $region97: #{tpu_custom_call.1} parent=5 // pred_check
        %p1445 = pneg %p1444
      $region98: #{tpu_custom_call.1} parent=5 // pred_check_branch
        %1447 = sbr.rel (%p1445) target = $region100
      $region99: #{tpu_custom_call.1} parent=5 // pred_region
        %s1448 = ssub.s32 %s26, 2
        // Predicated region
        $region101: #{tpu_custom_call.1} parent=99 // pred_check
          %p1449 = pneg %p295
        $region102: #{tpu_custom_call.1} parent=99 // pred_check_branch
          %1451 = sbr.rel (%p1449) target = $region104
        $region103: #{tpu_custom_call.1} parent=99 // pred_region
          %s1452 = sand.u32 %s280, 1
          %s1453 = scalar_lea.sflag [#allocation8], %s1452
          %s1454 = sand.u32 %s280, 1
          %s1455 = smul.addr %s1454, 8
          %s1456 = scalar_lea.vmem [#allocation18], %s1455
          %1457 = dma.done %s1453, 128
        $region104: #{tpu_custom_call.1} parent=99 // pred_fallthru
          _
      $region100: #{tpu_custom_call.1} parent=5 // pred_fallthru
        _
    $region6: #{tpu_custom_call.1} parent=1 // loop_footer
      %s30 = sadd.s32 1, %s26
    $region7: #{tpu_custom_call.1} parent=1 // loop_footer_branch
      %25 = sbr.rel target = $region3
    $region8: #{tpu_custom_call.1} parent=1 // loop_exit
      _
    %1458 = vsyncpa [#allocation7], 1
    %s1459 = scalar_lea.sflag [#allocation7], 1
    %1460 = vsyncpa %s1459, 1
    %1461 = vsyncpa [#allocation10], 1
    %s1462 = scalar_lea.sflag [#allocation10], 1
    %1463 = vsyncpa %s1462, 1
    %1464 = vsyncpa [#allocation13], 1
    %1465 = vsyncpa [#allocation16], 1
    %1466 = vsyncpa [#allocation8], 1
    %s1467 = scalar_lea.sflag [#allocation8], 1
    %1468 = vsyncpa %s1467, 1

</llo_original>
